<compile_context>
chip_gen: v5e
topology: v5e:2x2
jax: 0.10.0
libtpu: 0.0.40
codegen_flags: <defaults>
</compile_context>

<pallas_src>
import functools

import jax
import jax.numpy as jnp
from jax.experimental import pallas as pl
from jax.experimental.pallas import tpu as pltpu


# ----------------------------------------------------------------------------
# Fused Pallas kernel: conv1+bn1+relu -> conv2+bn2 -> (+shortcut) -> relu
# ----------------------------------------------------------------------------
def _fused_basic_block_kernel(x_ref, w1_ref, s1_ref, b1_ref,
                              w2_ref, s2_ref, b2_ref, *rest,
                              stride, H, W, Cin, Cout, has_ds):
    if has_ds:
        dsw_ref, dss_ref, dsb_ref, o_ref, *scratch = rest
    else:
        dsw_ref = dss_ref = dsb_ref = None
        o_ref, *scratch = rest
    rpad_ref = scratch[0]
    xpad_ref = scratch[1] if stride == 1 else None

    Ho = (H - 1) // stride + 1
    Wo = (W - 1) // stride + 1
    M = Ho * Wo
    bf16 = jnp.bfloat16

    # -- conv1 input with zero halo --------------------------------------
    if stride == 1:
        # x_ref: (1, H, W, Cin)  ->  pad in-kernel (no jnp.pad HBM pass).
        xpad_ref[...] = jnp.zeros_like(xpad_ref)
        xpad_ref[1:H + 1, 1:W + 1, :] = x_ref[0]

        def tap1(kh, kw):
            # x_pad[oh + kh, ow + kw, :] for all (oh, ow)
            return xpad_ref[kh:kh + Ho, kw:kw + Wo, :]
    else:
        # x_ref: (1, stride*stride, Hq, Wq, Cin) stride-phase layout with
        # x_pad[i, j, :] == x_ref[0, (i%s)*s + (j%s), i//s, j//s, :].
        def tap1(kh, kw):
            p = (kh % stride) * stride + (kw % stride)
            a = kh // stride
            b = kw // stride
            return x_ref[0, p, a:a + Ho, b:b + Wo, :]

    # -- conv1 (3x3, stride s) + bn1 + relu -------------------------------
    acc1 = jnp.zeros((M, Cout), jnp.float32)
    for kh in range(3):
        for kw in range(3):
            patch = tap1(kh, kw).reshape(M, Cin).astype(bf16)
            acc1 = acc1 + jnp.dot(patch, w1_ref[kh * 3 + kw].astype(bf16),
                                  preferred_element_type=jnp.float32)
    r = jnp.maximum(acc1 * s1_ref[...] + b1_ref[...], 0.0)

    # -- stage conv1 output (+1 zero halo) in VMEM for conv2 --------------
    rpad_ref[...] = jnp.zeros_like(rpad_ref)
    rpad_ref[1:Ho + 1, 1:Wo + 1, :] = r.reshape(Ho, Wo, Cout)

    # -- conv2 (3x3, stride 1) + bn2 ---------------------------------------
    acc2 = jnp.zeros((M, Cout), jnp.float32)
    for kh in range(3):
        for kw in range(3):
            patch = rpad_ref[kh:kh + Ho, kw:kw + Wo, :].reshape(M, Cout)
            acc2 = acc2 + jnp.dot(patch.astype(bf16),
                                  w2_ref[kh * 3 + kw].astype(bf16),
                                  preferred_element_type=jnp.float32)
    y = acc2 * s2_ref[...] + b2_ref[...]

    # -- shortcut ----------------------------------------------------------
    # x at the strided output positions == center tap of the padded input.
    sc_sp = tap1(1, 1).reshape(M, Cin)
    if has_ds:
        sc = jnp.dot(sc_sp.astype(bf16), dsw_ref[...].astype(bf16),
                     preferred_element_type=jnp.float32)
        sc = sc * dss_ref[...] + dsb_ref[...]
    else:
        sc = sc_sp.astype(jnp.float32)  # identity (Cin == Cout, stride == 1)

    # -- add + relu + store -------------------------------------------------
    out = jnp.maximum(y + sc, 0.0)
    o_ref[0] = out.reshape(Ho, Wo, Cout).astype(o_ref.dtype)


# ----------------------------------------------------------------------------
# Wrapper: pallas_call plumbing
# ----------------------------------------------------------------------------
def basic_block_forward(x_nchw, params, stride):
    """x_nchw: (N, Cin, H, W).  BN folded into per-channel (scale, bias)."""
    x = jnp.transpose(x_nchw, (0, 2, 3, 1))  # boundary glue: NCHW -> NHWC
    N, H, W, Cin = x.shape
    Cout = params["w1"].shape[-1]
    Ho = (H - 1) // stride + 1
    Wo = (W - 1) // stride + 1
    has_ds = params["ds_w"] is not None
    if not has_ds:
        assert stride == 1 and Cin == Cout

    w1 = params["w1"].reshape(9, Cin, Cout)
    w2 = params["w2"].reshape(9, Cout, Cout)
    s1 = params["s1"].reshape(1, Cout)
    b1 = params["b1"].reshape(1, Cout)
    s2 = params["s2"].reshape(1, Cout)
    b2 = params["b2"].reshape(1, Cout)

    scratch = [pltpu.VMEM((Ho + 2, Wo + 2, Cout), jnp.float32)]  # conv1 out + halo
    if stride == 1:
        # Raw input; padding happens inside the kernel (no wrapper pass).
        xin = x
        x_spec = pl.BlockSpec((1, H, W, Cin), lambda n: (n, 0, 0, 0))
        scratch.append(pltpu.VMEM((H + 2, W + 2, Cin), jnp.float32))
    else:
        # One fused XLA pass: pad + stride-phase (space-to-depth) layout so
        # the kernel computes only the strided output positions.
        s = stride
        Hq = -(-(H + 2) // s)
        Wq = -(-(W + 2) // s)
        xp = jnp.pad(x, ((0, 0), (1, s * Hq - H - 1), (1, s * Wq - W - 1), (0, 0)))
        xin = xp.reshape(N, Hq, s, Wq, s, Cin).transpose(0, 2, 4, 1, 3, 5)
        xin = xin.reshape(N, s * s, Hq, Wq, Cin)
        x_spec = pl.BlockSpec((1, s * s, Hq, Wq, Cin), lambda n: (n, 0, 0, 0, 0))

    in_specs = [
        x_spec,
        pl.BlockSpec((9, Cin, Cout), lambda n: (0, 0, 0)),
        pl.BlockSpec((1, Cout), lambda n: (0, 0)),
        pl.BlockSpec((1, Cout), lambda n: (0, 0)),
        pl.BlockSpec((9, Cout, Cout), lambda n: (0, 0, 0)),
        pl.BlockSpec((1, Cout), lambda n: (0, 0)),
        pl.BlockSpec((1, Cout), lambda n: (0, 0)),
    ]
    args = [xin, w1, s1, b1, w2, s2, b2]
    if has_ds:
        in_specs += [
            pl.BlockSpec((Cin, Cout), lambda n: (0, 0)),
            pl.BlockSpec((1, Cout), lambda n: (0, 0)),
            pl.BlockSpec((1, Cout), lambda n: (0, 0)),
        ]
        args += [params["ds_w"], params["ds_s"].reshape(1, Cout),
                 params["ds_b"].reshape(1, Cout)]

    kern = functools.partial(_fused_basic_block_kernel, stride=stride,
                             H=H, W=W, Cin=Cin, Cout=Cout, has_ds=has_ds)
    out = pl.pallas_call(
        kern,
        out_shape=jax.ShapeDtypeStruct((N, Ho, Wo, Cout), x.dtype),
        grid_spec=pltpu.PrefetchScalarGridSpec(
            num_scalar_prefetch=0,
            grid=(N,),
            in_specs=in_specs,
            out_specs=pl.BlockSpec((1, Ho, Wo, Cout), lambda n: (n, 0, 0, 0)),
            scratch_shapes=scratch,
        ),
        compiler_params=pltpu.CompilerParams(
            dimension_semantics=("parallel",),
            vmem_limit_bytes=32 * 1024 * 1024,
        ),
    )(*args)
    return jnp.transpose(out, (0, 3, 1, 2))  # back to NCHW


# ----------------------------------------------------------------------------
# Pure-JAX reference and parameter init
# ----------------------------------------------------------------------------
def basic_block_reference(x_nchw, params, stride, *, mxu_bf16=True):
    """mxu_bf16=True mirrors the kernel's bf16 MXU inputs / f32 accumulation."""
    cast = (lambda a: a.astype(jnp.bfloat16)) if mxu_bf16 else (lambda a: a)

    def conv(x, w, s, pad):
        return jax.lax.conv_general_dilated(
            cast(x), cast(w), (s, s), pad,
            dimension_numbers=("NHWC", "HWIO", "NHWC"),
            preferred_element_type=jnp.float32)

    x = jnp.transpose(x_nchw, (0, 2, 3, 1))
    r = conv(x, params["w1"], stride, [(1, 1), (1, 1)])
    r = jax.nn.relu(r * params["s1"] + params["b1"])
    r = conv(r, params["w2"], 1, [(1, 1), (1, 1)])
    r = r * params["s2"] + params["b2"]
    if params["ds_w"] is not None:
        cin, cout = params["ds_w"].shape
        sc = conv(x, params["ds_w"].reshape(1, 1, cin, cout), stride,
                  [(0, 0), (0, 0)])
        sc = sc * params["ds_s"] + params["ds_b"]
    else:
        sc = x
    out = jax.nn.relu(sc + r)
    return jnp.transpose(out, (0, 3, 1, 2))


def init_basic_block_params(key, cin, cout, stride, eps=1e-5):
    # TODO(synk): BatchNorm is folded in eval mode (running stats); training-
    # mode batch statistics are not reproduced.
    ks = jax.random.split(key, 15)

    def bn_fold(kg, kb, km, kv, c):
        gamma = jax.random.uniform(kg, (c,), jnp.float32, 0.5, 1.5)
        beta = 0.1 * jax.random.normal(kb, (c,), jnp.float32)
        mean = 0.1 * jax.random.normal(km, (c,), jnp.float32)
        var = jax.random.uniform(kv, (c,), jnp.float32, 0.5, 1.5)
        scale = gamma / jnp.sqrt(var + eps)
        bias = beta - mean * scale
        return scale, bias

    w1 = 0.1 * jax.random.normal(ks[0], (3, 3, cin, cout), jnp.float32)
    s1, b1 = bn_fold(ks[1], ks[2], ks[3], ks[4], cout)
    w2 = 0.1 * jax.random.normal(ks[5], (3, 3, cout, cout), jnp.float32)
    s2, b2 = bn_fold(ks[6], ks[7], ks[8], ks[9], cout)
    params = dict(w1=w1, s1=s1, b1=b1, w2=w2, s2=s2, b2=b2,
                  ds_w=None, ds_s=None, ds_b=None)
    if cin != cout or stride != 1:
        params["ds_w"] = 0.1 * jax.random.normal(ks[10], (cin, cout), jnp.float32)
        params["ds_s"], params["ds_b"] = bn_fold(ks[11], ks[12], ks[13], ks[14], cout)
    return params


if __name__ == "__main__":
    key = jax.random.PRNGKey(0)
    kx, kp1, kp2 = jax.random.split(key, 3)

    # Case 1: downsample path (Cin != Cout, stride 2).
    N, Cin, Cout, H, W, stride = 2, 4, 8, 16, 16, 2
    x_nchw = jax.random.normal(kx, (N, Cin, H, W), jnp.float32)
    params = init_basic_block_params(kp1, Cin, Cout, stride)
    out = jax.block_until_ready(basic_block_forward(x_nchw, params, stride))
    assert out.shape == (N, Cout, H // stride, W // stride)
    ref_m = basic_block_reference(x_nchw, params, stride, mxu_bf16=True)
    ref_f = basic_block_reference(x_nchw, params, stride, mxu_bf16=False)
    assert jnp.allclose(out, ref_m, atol=2e-3, rtol=2e-3), "case1 mismatch (bf16-matched ref)"
    assert jnp.allclose(out, ref_f, atol=5e-2, rtol=5e-2), "case1 mismatch (f32 ref)"

    # Case 2: identity shortcut (Cin == Cout, stride 1).
    params2 = init_basic_block_params(kp2, Cin, Cin, 1)
    out2 = jax.block_until_ready(basic_block_forward(x_nchw, params2, 1))
    assert out2.shape == (N, Cin, H, W)
    ref2_m = basic_block_reference(x_nchw, params2, 1, mxu_bf16=True)
    ref2_f = basic_block_reference(x_nchw, params2, 1, mxu_bf16=False)
    assert jnp.allclose(out2, ref2_m, atol=2e-3, rtol=2e-3), "case2 mismatch (bf16-matched ref)"
    assert jnp.allclose(out2, ref2_f, atol=5e-2, rtol=5e-2), "case2 mismatch (f32 ref)"

    print("KERNEL_OK")
</pallas_src>

<mosaic_0001>
module attributes {stable_mosaic.version = 11 : i64} {
  func.func @_fused_basic_block_kernel(%arg0: i32, %arg1: memref<1x4x9x9x4xf32, #tpu.memory_space<vmem>>, %arg2: memref<9x4x8xf32, #tpu.memory_space<vmem>>, %arg3: memref<1x8xf32, #tpu.memory_space<vmem>>, %arg4: memref<1x8xf32, #tpu.memory_space<vmem>>, %arg5: memref<9x8x8xf32, #tpu.memory_space<vmem>>, %arg6: memref<1x8xf32, #tpu.memory_space<vmem>>, %arg7: memref<1x8xf32, #tpu.memory_space<vmem>>, %arg8: memref<4x8xf32, #tpu.memory_space<vmem>>, %arg9: memref<1x8xf32, #tpu.memory_space<vmem>>, %arg10: memref<1x8xf32, #tpu.memory_space<vmem>>, %arg11: memref<1x8x8x8xf32, #tpu.memory_space<vmem>>, %arg12: memref<10x10x8xf32, #tpu.memory_space<vmem>>) attributes {dimension_semantics = [#tpu.dimension_semantics<parallel>], iteration_bounds = array<i64: 2>, scalar_prefetch = 0 : i64, scratch_operands = 1 : i64, tpu.core_type = #tpu.core_type<tc>, window_params = [{transform_indices = @transform_0, window_bounds = array<i64: 1, 4, 9, 9, 4>}, {pipeline_mode = #tpu.pipeline_mode<synchronous>, transform_indices = @transform_1, window_bounds = array<i64: 9, 4, 8>}, {pipeline_mode = #tpu.pipeline_mode<synchronous>, transform_indices = @transform_2, window_bounds = array<i64: 1, 8>}, {pipeline_mode = #tpu.pipeline_mode<synchronous>, transform_indices = @transform_3, window_bounds = array<i64: 1, 8>}, {pipeline_mode = #tpu.pipeline_mode<synchronous>, transform_indices = @transform_4, window_bounds = array<i64: 9, 8, 8>}, {pipeline_mode = #tpu.pipeline_mode<synchronous>, transform_indices = @transform_5, window_bounds = array<i64: 1, 8>}, {pipeline_mode = #tpu.pipeline_mode<synchronous>, transform_indices = @transform_6, window_bounds = array<i64: 1, 8>}, {pipeline_mode = #tpu.pipeline_mode<synchronous>, transform_indices = @transform_7, window_bounds = array<i64: 4, 8>}, {pipeline_mode = #tpu.pipeline_mode<synchronous>, transform_indices = @transform_8, window_bounds = array<i64: 1, 8>}, {pipeline_mode = #tpu.pipeline_mode<synchronous>, transform_indices = @transform_9, window_bounds = array<i64: 1, 8>}, {transform_indices = @transform_10, window_bounds = array<i64: 1, 8, 8, 8>}]} {
    %cst = arith.constant 0.000000e+00 : f32
    %0 = vector.broadcast %cst : f32 to vector<64x8xf32>
    %c0 = arith.constant 0 : index
    %c0_0 = arith.constant 0 : index
    %c0_1 = arith.constant 0 : index
    %c0_2 = arith.constant 0 : index
    %c0_3 = arith.constant 0 : index
    %1 = vector.load %arg1[%c0, %c0_0, %c0_1, %c0_2, %c0_3] : memref<1x4x9x9x4xf32, #tpu.memory_space<vmem>>, vector<1x1x8x8x4xf32>
    %2 = vector.shape_cast %1 : vector<1x1x8x8x4xf32> to vector<8x8x4xf32>
    %3 = vector.shape_cast %2 : vector<8x8x4xf32> to vector<64x4xf32>
    %4 = arith.truncf %3 : vector<64x4xf32> to vector<64x4xbf16>
    %c0_4 = arith.constant 0 : index
    %c0_5 = arith.constant 0 : index
    %c0_6 = arith.constant 0 : index
    %5 = vector.load %arg2[%c0_4, %c0_5, %c0_6] : memref<9x4x8xf32, #tpu.memory_space<vmem>>, vector<1x4x8xf32>
    %6 = vector.shape_cast %5 : vector<1x4x8xf32> to vector<4x8xf32>
    %7 = arith.truncf %6 : vector<4x8xf32> to vector<4x8xbf16>
    %cst_7 = arith.constant dense<0.000000e+00> : vector<64x8xf32>
    %8 = tpu.matmul %4, %7, %cst_7 {dimension_numbers = #tpu.dot_dimension_numbers<[1], [0], [0], [1], [0, 0, 1, 1], [], []>} : vector<64x4xbf16>, vector<4x8xbf16>, vector<64x8xf32> -> vector<64x8xf32>
    %9 = arith.addf %0, %8 : vector<64x8xf32>
    %c0_8 = arith.constant 0 : index
    %c1 = arith.constant 1 : index
    %c0_9 = arith.constant 0 : index
    %c0_10 = arith.constant 0 : index
    %c0_11 = arith.constant 0 : index
    %10 = vector.load %arg1[%c0_8, %c1, %c0_9, %c0_10, %c0_11] : memref<1x4x9x9x4xf32, #tpu.memory_space<vmem>>, vector<1x1x8x8x4xf32>
    %11 = vector.shape_cast %10 : vector<1x1x8x8x4xf32> to vector<8x8x4xf32>
    %12 = vector.shape_cast %11 : vector<8x8x4xf32> to vector<64x4xf32>
    %13 = arith.truncf %12 : vector<64x4xf32> to vector<64x4xbf16>
    %c1_12 = arith.constant 1 : index
    %c0_13 = arith.constant 0 : index
    %c0_14 = arith.constant 0 : index
    %14 = vector.load %arg2[%c1_12, %c0_13, %c0_14] : memref<9x4x8xf32, #tpu.memory_space<vmem>>, vector<1x4x8xf32>
    %15 = vector.shape_cast %14 : vector<1x4x8xf32> to vector<4x8xf32>
    %16 = arith.truncf %15 : vector<4x8xf32> to vector<4x8xbf16>
    %cst_15 = arith.constant dense<0.000000e+00> : vector<64x8xf32>
    %17 = tpu.matmul %13, %16, %cst_15 {dimension_numbers = #tpu.dot_dimension_numbers<[1], [0], [0], [1], [0, 0, 1, 1], [], []>} : vector<64x4xbf16>, vector<4x8xbf16>, vector<64x8xf32> -> vector<64x8xf32>
    %18 = arith.addf %9, %17 : vector<64x8xf32>
    %c0_16 = arith.constant 0 : index
    %c0_17 = arith.constant 0 : index
    %c0_18 = arith.constant 0 : index
    %c1_19 = arith.constant 1 : index
    %c0_20 = arith.constant 0 : index
    %19 = vector.load %arg1[%c0_16, %c0_17, %c0_18, %c1_19, %c0_20] : memref<1x4x9x9x4xf32, #tpu.memory_space<vmem>>, vector<1x1x8x8x4xf32>
    %20 = vector.shape_cast %19 : vector<1x1x8x8x4xf32> to vector<8x8x4xf32>
    %21 = vector.shape_cast %20 : vector<8x8x4xf32> to vector<64x4xf32>
    %22 = arith.truncf %21 : vector<64x4xf32> to vector<64x4xbf16>
    %c2 = arith.constant 2 : index
    %c0_21 = arith.constant 0 : index
    %c0_22 = arith.constant 0 : index
    %23 = vector.load %arg2[%c2, %c0_21, %c0_22] : memref<9x4x8xf32, #tpu.memory_space<vmem>>, vector<1x4x8xf32>
    %24 = vector.shape_cast %23 : vector<1x4x8xf32> to vector<4x8xf32>
    %25 = arith.truncf %24 : vector<4x8xf32> to vector<4x8xbf16>
    %cst_23 = arith.constant dense<0.000000e+00> : vector<64x8xf32>
    %26 = tpu.matmul %22, %25, %cst_23 {dimension_numbers = #tpu.dot_dimension_numbers<[1], [0], [0], [1], [0, 0, 1, 1], [], []>} : vector<64x4xbf16>, vector<4x8xbf16>, vector<64x8xf32> -> vector<64x8xf32>
    %27 = arith.addf %18, %26 : vector<64x8xf32>
    %c0_24 = arith.constant 0 : index
    %c2_25 = arith.constant 2 : index
    %c0_26 = arith.constant 0 : index
    %c0_27 = arith.constant 0 : index
    %c0_28 = arith.constant 0 : index
    %28 = vector.load %arg1[%c0_24, %c2_25, %c0_26, %c0_27, %c0_28] : memref<1x4x9x9x4xf32, #tpu.memory_space<vmem>>, vector<1x1x8x8x4xf32>
    %29 = vector.shape_cast %28 : vector<1x1x8x8x4xf32> to vector<8x8x4xf32>
    %30 = vector.shape_cast %29 : vector<8x8x4xf32> to vector<64x4xf32>
    %31 = arith.truncf %30 : vector<64x4xf32> to vector<64x4xbf16>
    %c3 = arith.constant 3 : index
    %c0_29 = arith.constant 0 : index
    %c0_30 = arith.constant 0 : index
    %32 = vector.load %arg2[%c3, %c0_29, %c0_30] : memref<9x4x8xf32, #tpu.memory_space<vmem>>, vector<1x4x8xf32>
    %33 = vector.shape_cast %32 : vector<1x4x8xf32> to vector<4x8xf32>
    %34 = arith.truncf %33 : vector<4x8xf32> to vector<4x8xbf16>
    %cst_31 = arith.constant dense<0.000000e+00> : vector<64x8xf32>
    %35 = tpu.matmul %31, %34, %cst_31 {dimension_numbers = #tpu.dot_dimension_numbers<[1], [0], [0], [1], [0, 0, 1, 1], [], []>} : vector<64x4xbf16>, vector<4x8xbf16>, vector<64x8xf32> -> vector<64x8xf32>
    %36 = arith.addf %27, %35 : vector<64x8xf32>
    %c0_32 = arith.constant 0 : index
    %c3_33 = arith.constant 3 : index
    %c0_34 = arith.constant 0 : index
    %c0_35 = arith.constant 0 : index
    %c0_36 = arith.constant 0 : index
    %37 = vector.load %arg1[%c0_32, %c3_33, %c0_34, %c0_35, %c0_36] : memref<1x4x9x9x4xf32, #tpu.memory_space<vmem>>, vector<1x1x8x8x4xf32>
    %38 = vector.shape_cast %37 : vector<1x1x8x8x4xf32> to vector<8x8x4xf32>
    %39 = vector.shape_cast %38 : vector<8x8x4xf32> to vector<64x4xf32>
    %40 = arith.truncf %39 : vector<64x4xf32> to vector<64x4xbf16>
    %c4 = arith.constant 4 : index
    %c0_37 = arith.constant 0 : index
    %c0_38 = arith.constant 0 : index
    %41 = vector.load %arg2[%c4, %c0_37, %c0_38] : memref<9x4x8xf32, #tpu.memory_space<vmem>>, vector<1x4x8xf32>
    %42 = vector.shape_cast %41 : vector<1x4x8xf32> to vector<4x8xf32>
    %43 = arith.truncf %42 : vector<4x8xf32> to vector<4x8xbf16>
    %cst_39 = arith.constant dense<0.000000e+00> : vector<64x8xf32>
    %44 = tpu.matmul %40, %43, %cst_39 {dimension_numbers = #tpu.dot_dimension_numbers<[1], [0], [0], [1], [0, 0, 1, 1], [], []>} : vector<64x4xbf16>, vector<4x8xbf16>, vector<64x8xf32> -> vector<64x8xf32>
    %45 = arith.addf %36, %44 : vector<64x8xf32>
    %c0_40 = arith.constant 0 : index
    %c2_41 = arith.constant 2 : index
    %c0_42 = arith.constant 0 : index
    %c1_43 = arith.constant 1 : index
    %c0_44 = arith.constant 0 : index
    %46 = vector.load %arg1[%c0_40, %c2_41, %c0_42, %c1_43, %c0_44] : memref<1x4x9x9x4xf32, #tpu.memory_space<vmem>>, vector<1x1x8x8x4xf32>
    %47 = vector.shape_cast %46 : vector<1x1x8x8x4xf32> to vector<8x8x4xf32>
    %48 = vector.shape_cast %47 : vector<8x8x4xf32> to vector<64x4xf32>
    %49 = arith.truncf %48 : vector<64x4xf32> to vector<64x4xbf16>
    %c5 = arith.constant 5 : index
    %c0_45 = arith.constant 0 : index
    %c0_46 = arith.constant 0 : index
    %50 = vector.load %arg2[%c5, %c0_45, %c0_46] : memref<9x4x8xf32, #tpu.memory_space<vmem>>, vector<1x4x8xf32>
    %51 = vector.shape_cast %50 : vector<1x4x8xf32> to vector<4x8xf32>
    %52 = arith.truncf %51 : vector<4x8xf32> to vector<4x8xbf16>
    %cst_47 = arith.constant dense<0.000000e+00> : vector<64x8xf32>
    %53 = tpu.matmul %49, %52, %cst_47 {dimension_numbers = #tpu.dot_dimension_numbers<[1], [0], [0], [1], [0, 0, 1, 1], [], []>} : vector<64x4xbf16>, vector<4x8xbf16>, vector<64x8xf32> -> vector<64x8xf32>
    %54 = arith.addf %45, %53 : vector<64x8xf32>
    %c0_48 = arith.constant 0 : index
    %c0_49 = arith.constant 0 : index
    %c1_50 = arith.constant 1 : index
    %c0_51 = arith.constant 0 : index
    %c0_52 = arith.constant 0 : index
    %55 = vector.load %arg1[%c0_48, %c0_49, %c1_50, %c0_51, %c0_52] : memref<1x4x9x9x4xf32, #tpu.memory_space<vmem>>, vector<1x1x8x8x4xf32>
    %56 = vector.shape_cast %55 : vector<1x1x8x8x4xf32> to vector<8x8x4xf32>
    %57 = vector.shape_cast %56 : vector<8x8x4xf32> to vector<64x4xf32>
    %58 = arith.truncf %57 : vector<64x4xf32> to vector<64x4xbf16>
    %c6 = arith.constant 6 : index
    %c0_53 = arith.constant 0 : index
    %c0_54 = arith.constant 0 : index
    %59 = vector.load %arg2[%c6, %c0_53, %c0_54] : memref<9x4x8xf32, #tpu.memory_space<vmem>>, vector<1x4x8xf32>
    %60 = vector.shape_cast %59 : vector<1x4x8xf32> to vector<4x8xf32>
    %61 = arith.truncf %60 : vector<4x8xf32> to vector<4x8xbf16>
    %cst_55 = arith.constant dense<0.000000e+00> : vector<64x8xf32>
    %62 = tpu.matmul %58, %61, %cst_55 {dimension_numbers = #tpu.dot_dimension_numbers<[1], [0], [0], [1], [0, 0, 1, 1], [], []>} : vector<64x4xbf16>, vector<4x8xbf16>, vector<64x8xf32> -> vector<64x8xf32>
    %63 = arith.addf %54, %62 : vector<64x8xf32>
    %c0_56 = arith.constant 0 : index
    %c1_57 = arith.constant 1 : index
    %c1_58 = arith.constant 1 : index
    %c0_59 = arith.constant 0 : index
    %c0_60 = arith.constant 0 : index
    %64 = vector.load %arg1[%c0_56, %c1_57, %c1_58, %c0_59, %c0_60] : memref<1x4x9x9x4xf32, #tpu.memory_space<vmem>>, vector<1x1x8x8x4xf32>
    %65 = vector.shape_cast %64 : vector<1x1x8x8x4xf32> to vector<8x8x4xf32>
    %66 = vector.shape_cast %65 : vector<8x8x4xf32> to vector<64x4xf32>
    %67 = arith.truncf %66 : vector<64x4xf32> to vector<64x4xbf16>
    %c7 = arith.constant 7 : index
    %c0_61 = arith.constant 0 : index
    %c0_62 = arith.constant 0 : index
    %68 = vector.load %arg2[%c7, %c0_61, %c0_62] : memref<9x4x8xf32, #tpu.memory_space<vmem>>, vector<1x4x8xf32>
    %69 = vector.shape_cast %68 : vector<1x4x8xf32> to vector<4x8xf32>
    %70 = arith.truncf %69 : vector<4x8xf32> to vector<4x8xbf16>
    %cst_63 = arith.constant dense<0.000000e+00> : vector<64x8xf32>
    %71 = tpu.matmul %67, %70, %cst_63 {dimension_numbers = #tpu.dot_dimension_numbers<[1], [0], [0], [1], [0, 0, 1, 1], [], []>} : vector<64x4xbf16>, vector<4x8xbf16>, vector<64x8xf32> -> vector<64x8xf32>
    %72 = arith.addf %63, %71 : vector<64x8xf32>
    %c0_64 = arith.constant 0 : index
    %c0_65 = arith.constant 0 : index
    %c1_66 = arith.constant 1 : index
    %c1_67 = arith.constant 1 : index
    %c0_68 = arith.constant 0 : index
    %73 = vector.load %arg1[%c0_64, %c0_65, %c1_66, %c1_67, %c0_68] : memref<1x4x9x9x4xf32, #tpu.memory_space<vmem>>, vector<1x1x8x8x4xf32>
    %74 = vector.shape_cast %73 : vector<1x1x8x8x4xf32> to vector<8x8x4xf32>
    %75 = vector.shape_cast %74 : vector<8x8x4xf32> to vector<64x4xf32>
    %76 = arith.truncf %75 : vector<64x4xf32> to vector<64x4xbf16>
    %c8 = arith.constant 8 : index
    %c0_69 = arith.constant 0 : index
    %c0_70 = arith.constant 0 : index
    %77 = vector.load %arg2[%c8, %c0_69, %c0_70] : memref<9x4x8xf32, #tpu.memory_space<vmem>>, vector<1x4x8xf32>
    %78 = vector.shape_cast %77 : vector<1x4x8xf32> to vector<4x8xf32>
    %79 = arith.truncf %78 : vector<4x8xf32> to vector<4x8xbf16>
    %cst_71 = arith.constant dense<0.000000e+00> : vector<64x8xf32>
    %80 = tpu.matmul %76, %79, %cst_71 {dimension_numbers = #tpu.dot_dimension_numbers<[1], [0], [0], [1], [0, 0, 1, 1], [], []>} : vector<64x4xbf16>, vector<4x8xbf16>, vector<64x8xf32> -> vector<64x8xf32>
    %81 = arith.addf %72, %80 : vector<64x8xf32>
    %c0_72 = arith.constant 0 : index
    %c0_73 = arith.constant 0 : index
    %82 = vector.load %arg3[%c0_72, %c0_73] : memref<1x8xf32, #tpu.memory_space<vmem>>, vector<1x8xf32>
    %83 = vector.broadcast %82 : vector<1x8xf32> to vector<64x8xf32>
    %84 = arith.mulf %81, %83 : vector<64x8xf32>
    %c0_74 = arith.constant 0 : index
    %c0_75 = arith.constant 0 : index
    %85 = vector.load %arg4[%c0_74, %c0_75] : memref<1x8xf32, #tpu.memory_space<vmem>>, vector<1x8xf32>
    %86 = vector.broadcast %85 : vector<1x8xf32> to vector<64x8xf32>
    %87 = arith.addf %84, %86 : vector<64x8xf32>
    %cst_76 = arith.constant 0.000000e+00 : f32
    %88 = vector.broadcast %cst_76 : f32 to vector<64x8xf32>
    %89 = arith.maximumf %87, %88 : vector<64x8xf32>
    %cst_77 = arith.constant 0.000000e+00 : f32
    %90 = vector.broadcast %cst_77 : f32 to vector<10x10x8xf32>
    %c0_78 = arith.constant 0 : index
    %c0_79 = arith.constant 0 : index
    %c0_80 = arith.constant 0 : index
    %91 = vector.load %arg12[%c0_78, %c0_79, %c0_80] : memref<10x10x8xf32, #tpu.memory_space<vmem>>, vector<10x10x8xf32>
    tpu.vector_store %arg12[%c0_78, %c0_79, %c0_80], %90 {strides = array<i32>} : memref<10x10x8xf32, #tpu.memory_space<vmem>>, vector<10x10x8xf32>,
    %92 = vector.shape_cast %89 : vector<64x8xf32> to vector<8x8x8xf32>
    %c1_81 = arith.constant 1 : index
    %c1_82 = arith.constant 1 : index
    %c0_83 = arith.constant 0 : index
    %93 = vector.load %arg12[%c1_81, %c1_82, %c0_83] : memref<10x10x8xf32, #tpu.memory_space<vmem>>, vector<8x8x8xf32>
    tpu.vector_store %arg12[%c1_81, %c1_82, %c0_83], %92 {strides = array<i32>} : memref<10x10x8xf32, #tpu.memory_space<vmem>>, vector<8x8x8xf32>,
    %cst_84 = arith.constant 0.000000e+00 : f32
    %94 = vector.broadcast %cst_84 : f32 to vector<64x8xf32>
    %c0_85 = arith.constant 0 : index
    %c0_86 = arith.constant 0 : index
    %c0_87 = arith.constant 0 : index
    %95 = vector.load %arg12[%c0_85, %c0_86, %c0_87] : memref<10x10x8xf32, #tpu.memory_space<vmem>>, vector<8x8x8xf32>
    %96 = vector.shape_cast %95 : vector<8x8x8xf32> to vector<64x8xf32>
    %97 = arith.truncf %96 : vector<64x8xf32> to vector<64x8xbf16>
    %c0_88 = arith.constant 0 : index
    %c0_89 = arith.constant 0 : index
    %c0_90 = arith.constant 0 : index
    %98 = vector.load %arg5[%c0_88, %c0_89, %c0_90] : memref<9x8x8xf32, #tpu.memory_space<vmem>>, vector<1x8x8xf32>
    %99 = vector.shape_cast %98 : vector<1x8x8xf32> to vector<8x8xf32>
    %100 = arith.truncf %99 : vector<8x8xf32> to vector<8x8xbf16>
    %cst_91 = arith.constant dense<0.000000e+00> : vector<64x8xf32>
    %101 = tpu.matmul %97, %100, %cst_91 {dimension_numbers = #tpu.dot_dimension_numbers<[1], [0], [0], [1], [0, 0, 1, 1], [], []>} : vector<64x8xbf16>, vector<8x8xbf16>, vector<64x8xf32> -> vector<64x8xf32>
    %102 = arith.addf %94, %101 : vector<64x8xf32>
    %c0_92 = arith.constant 0 : index
    %c1_93 = arith.constant 1 : index
    %c0_94 = arith.constant 0 : index
    %103 = vector.load %arg12[%c0_92, %c1_93, %c0_94] : memref<10x10x8xf32, #tpu.memory_space<vmem>>, vector<8x8x8xf32>
    %104 = vector.shape_cast %103 : vector<8x8x8xf32> to vector<64x8xf32>
    %105 = arith.truncf %104 : vector<64x8xf32> to vector<64x8xbf16>
    %c1_95 = arith.constant 1 : index
    %c0_96 = arith.constant 0 : index
    %c0_97 = arith.constant 0 : index
    %106 = vector.load %arg5[%c1_95, %c0_96, %c0_97] : memref<9x8x8xf32, #tpu.memory_space<vmem>>, vector<1x8x8xf32>
    %107 = vector.shape_cast %106 : vector<1x8x8xf32> to vector<8x8xf32>
    %108 = arith.truncf %107 : vector<8x8xf32> to vector<8x8xbf16>
    %cst_98 = arith.constant dense<0.000000e+00> : vector<64x8xf32>
    %109 = tpu.matmul %105, %108, %cst_98 {dimension_numbers = #tpu.dot_dimension_numbers<[1], [0], [0], [1], [0, 0, 1, 1], [], []>} : vector<64x8xbf16>, vector<8x8xbf16>, vector<64x8xf32> -> vector<64x8xf32>
    %110 = arith.addf %102, %109 : vector<64x8xf32>
    %c0_99 = arith.constant 0 : index
    %c2_100 = arith.constant 2 : index
    %c0_101 = arith.constant 0 : index
    %111 = vector.load %arg12[%c0_99, %c2_100, %c0_101] : memref<10x10x8xf32, #tpu.memory_space<vmem>>, vector<8x8x8xf32>
    %112 = vector.shape_cast %111 : vector<8x8x8xf32> to vector<64x8xf32>
    %113 = arith.truncf %112 : vector<64x8xf32> to vector<64x8xbf16>
    %c2_102 = arith.constant 2 : index
    %c0_103 = arith.constant 0 : index
    %c0_104 = arith.constant 0 : index
    %114 = vector.load %arg5[%c2_102, %c0_103, %c0_104] : memref<9x8x8xf32, #tpu.memory_space<vmem>>, vector<1x8x8xf32>
    %115 = vector.shape_cast %114 : vector<1x8x8xf32> to vector<8x8xf32>
    %116 = arith.truncf %115 : vector<8x8xf32> to vector<8x8xbf16>
    %cst_105 = arith.constant dense<0.000000e+00> : vector<64x8xf32>
    %117 = tpu.matmul %113, %116, %cst_105 {dimension_numbers = #tpu.dot_dimension_numbers<[1], [0], [0], [1], [0, 0, 1, 1], [], []>} : vector<64x8xbf16>, vector<8x8xbf16>, vector<64x8xf32> -> vector<64x8xf32>
    %118 = arith.addf %110, %117 : vector<64x8xf32>
    %c1_106 = arith.constant 1 : index
    %c0_107 = arith.constant 0 : index
    %c0_108 = arith.constant 0 : index
    %119 = vector.load %arg12[%c1_106, %c0_107, %c0_108] : memref<10x10x8xf32, #tpu.memory_space<vmem>>, vector<8x8x8xf32>
    %120 = vector.shape_cast %119 : vector<8x8x8xf32> to vector<64x8xf32>
    %121 = arith.truncf %120 : vector<64x8xf32> to vector<64x8xbf16>
    %c3_109 = arith.constant 3 : index
    %c0_110 = arith.constant 0 : index
    %c0_111 = arith.constant 0 : index
    %122 = vector.load %arg5[%c3_109, %c0_110, %c0_111] : memref<9x8x8xf32, #tpu.memory_space<vmem>>, vector<1x8x8xf32>
    %123 = vector.shape_cast %122 : vector<1x8x8xf32> to vector<8x8xf32>
    %124 = arith.truncf %123 : vector<8x8xf32> to vector<8x8xbf16>
    %cst_112 = arith.constant dense<0.000000e+00> : vector<64x8xf32>
    %125 = tpu.matmul %121, %124, %cst_112 {dimension_numbers = #tpu.dot_dimension_numbers<[1], [0], [0], [1], [0, 0, 1, 1], [], []>} : vector<64x8xbf16>, vector<8x8xbf16>, vector<64x8xf32> -> vector<64x8xf32>
    %126 = arith.addf %118, %125 : vector<64x8xf32>
    %c1_113 = arith.constant 1 : index
    %c1_114 = arith.constant 1 : index
    %c0_115 = arith.constant 0 : index
    %127 = vector.load %arg12[%c1_113, %c1_114, %c0_115] : memref<10x10x8xf32, #tpu.memory_space<vmem>>, vector<8x8x8xf32>
    %128 = vector.shape_cast %127 : vector<8x8x8xf32> to vector<64x8xf32>
    %129 = arith.truncf %128 : vector<64x8xf32> to vector<64x8xbf16>
    %c4_116 = arith.constant 4 : index
    %c0_117 = arith.constant 0 : index
    %c0_118 = arith.constant 0 : index
    %130 = vector.load %arg5[%c4_116, %c0_117, %c0_118] : memref<9x8x8xf32, #tpu.memory_space<vmem>>, vector<1x8x8xf32>
    %131 = vector.shape_cast %130 : vector<1x8x8xf32> to vector<8x8xf32>
    %132 = arith.truncf %131 : vector<8x8xf32> to vector<8x8xbf16>
    %cst_119 = arith.constant dense<0.000000e+00> : vector<64x8xf32>
    %133 = tpu.matmul %129, %132, %cst_119 {dimension_numbers = #tpu.dot_dimension_numbers<[1], [0], [0], [1], [0, 0, 1, 1], [], []>} : vector<64x8xbf16>, vector<8x8xbf16>, vector<64x8xf32> -> vector<64x8xf32>
    %134 = arith.addf %126, %133 : vector<64x8xf32>
    %c1_120 = arith.constant 1 : index
    %c2_121 = arith.constant 2 : index
    %c0_122 = arith.constant 0 : index
    %135 = vector.load %arg12[%c1_120, %c2_121, %c0_122] : memref<10x10x8xf32, #tpu.memory_space<vmem>>, vector<8x8x8xf32>
    %136 = vector.shape_cast %135 : vector<8x8x8xf32> to vector<64x8xf32>
    %137 = arith.truncf %136 : vector<64x8xf32> to vector<64x8xbf16>
    %c5_123 = arith.constant 5 : index
    %c0_124 = arith.constant 0 : index
    %c0_125 = arith.constant 0 : index
    %138 = vector.load %arg5[%c5_123, %c0_124, %c0_125] : memref<9x8x8xf32, #tpu.memory_space<vmem>>, vector<1x8x8xf32>
    %139 = vector.shape_cast %138 : vector<1x8x8xf32> to vector<8x8xf32>
    %140 = arith.truncf %139 : vector<8x8xf32> to vector<8x8xbf16>
    %cst_126 = arith.constant dense<0.000000e+00> : vector<64x8xf32>
    %141 = tpu.matmul %137, %140, %cst_126 {dimension_numbers = #tpu.dot_dimension_numbers<[1], [0], [0], [1], [0, 0, 1, 1], [], []>} : vector<64x8xbf16>, vector<8x8xbf16>, vector<64x8xf32> -> vector<64x8xf32>
    %142 = arith.addf %134, %141 : vector<64x8xf32>
    %c2_127 = arith.constant 2 : index
    %c0_128 = arith.constant 0 : index
    %c0_129 = arith.constant 0 : index
    %143 = vector.load %arg12[%c2_127, %c0_128, %c0_129] : memref<10x10x8xf32, #tpu.memory_space<vmem>>, vector<8x8x8xf32>
    %144 = vector.shape_cast %143 : vector<8x8x8xf32> to vector<64x8xf32>
    %145 = arith.truncf %144 : vector<64x8xf32> to vector<64x8xbf16>
    %c6_130 = arith.constant 6 : index
    %c0_131 = arith.constant 0 : index
    %c0_132 = arith.constant 0 : index
    %146 = vector.load %arg5[%c6_130, %c0_131, %c0_132] : memref<9x8x8xf32, #tpu.memory_space<vmem>>, vector<1x8x8xf32>
    %147 = vector.shape_cast %146 : vector<1x8x8xf32> to vector<8x8xf32>
    %148 = arith.truncf %147 : vector<8x8xf32> to vector<8x8xbf16>
    %cst_133 = arith.constant dense<0.000000e+00> : vector<64x8xf32>
    %149 = tpu.matmul %145, %148, %cst_133 {dimension_numbers = #tpu.dot_dimension_numbers<[1], [0], [0], [1], [0, 0, 1, 1], [], []>} : vector<64x8xbf16>, vector<8x8xbf16>, vector<64x8xf32> -> vector<64x8xf32>
    %150 = arith.addf %142, %149 : vector<64x8xf32>
    %c2_134 = arith.constant 2 : index
    %c1_135 = arith.constant 1 : index
    %c0_136 = arith.constant 0 : index
    %151 = vector.load %arg12[%c2_134, %c1_135, %c0_136] : memref<10x10x8xf32, #tpu.memory_space<vmem>>, vector<8x8x8xf32>
    %152 = vector.shape_cast %151 : vector<8x8x8xf32> to vector<64x8xf32>
    %153 = arith.truncf %152 : vector<64x8xf32> to vector<64x8xbf16>
    %c7_137 = arith.constant 7 : index
    %c0_138 = arith.constant 0 : index
    %c0_139 = arith.constant 0 : index
    %154 = vector.load %arg5[%c7_137, %c0_138, %c0_139] : memref<9x8x8xf32, #tpu.memory_space<vmem>>, vector<1x8x8xf32>
    %155 = vector.shape_cast %154 : vector<1x8x8xf32> to vector<8x8xf32>
    %156 = arith.truncf %155 : vector<8x8xf32> to vector<8x8xbf16>
    %cst_140 = arith.constant dense<0.000000e+00> : vector<64x8xf32>
    %157 = tpu.matmul %153, %156, %cst_140 {dimension_numbers = #tpu.dot_dimension_numbers<[1], [0], [0], [1], [0, 0, 1, 1], [], []>} : vector<64x8xbf16>, vector<8x8xbf16>, vector<64x8xf32> -> vector<64x8xf32>
    %158 = arith.addf %150, %157 : vector<64x8xf32>
    %c2_141 = arith.constant 2 : index
    %c2_142 = arith.constant 2 : index
    %c0_143 = arith.constant 0 : index
    %159 = vector.load %arg12[%c2_141, %c2_142, %c0_143] : memref<10x10x8xf32, #tpu.memory_space<vmem>>, vector<8x8x8xf32>
    %160 = vector.shape_cast %159 : vector<8x8x8xf32> to vector<64x8xf32>
    %161 = arith.truncf %160 : vector<64x8xf32> to vector<64x8xbf16>
    %c8_144 = arith.constant 8 : index
    %c0_145 = arith.constant 0 : index
    %c0_146 = arith.constant 0 : index
    %162 = vector.load %arg5[%c8_144, %c0_145, %c0_146] : memref<9x8x8xf32, #tpu.memory_space<vmem>>, vector<1x8x8xf32>
    %163 = vector.shape_cast %162 : vector<1x8x8xf32> to vector<8x8xf32>
    %164 = arith.truncf %163 : vector<8x8xf32> to vector<8x8xbf16>
    %cst_147 = arith.constant dense<0.000000e+00> : vector<64x8xf32>
    %165 = tpu.matmul %161, %164, %cst_147 {dimension_numbers = #tpu.dot_dimension_numbers<[1], [0], [0], [1], [0, 0, 1, 1], [], []>} : vector<64x8xbf16>, vector<8x8xbf16>, vector<64x8xf32> -> vector<64x8xf32>
    %166 = arith.addf %158, %165 : vector<64x8xf32>
    %c0_148 = arith.constant 0 : index
    %c0_149 = arith.constant 0 : index
    %167 = vector.load %arg6[%c0_148, %c0_149] : memref<1x8xf32, #tpu.memory_space<vmem>>, vector<1x8xf32>
    %168 = vector.broadcast %167 : vector<1x8xf32> to vector<64x8xf32>
    %169 = arith.mulf %166, %168 : vector<64x8xf32>
    %c0_150 = arith.constant 0 : index
    %c0_151 = arith.constant 0 : index
    %170 = vector.load %arg7[%c0_150, %c0_151] : memref<1x8xf32, #tpu.memory_space<vmem>>, vector<1x8xf32>
    %171 = vector.broadcast %170 : vector<1x8xf32> to vector<64x8xf32>
    %172 = arith.addf %169, %171 : vector<64x8xf32>
    %c0_152 = arith.constant 0 : index
    %c3_153 = arith.constant 3 : index
    %c0_154 = arith.constant 0 : index
    %c0_155 = arith.constant 0 : index
    %c0_156 = arith.constant 0 : index
    %173 = vector.load %arg1[%c0_152, %c3_153, %c0_154, %c0_155, %c0_156] : memref<1x4x9x9x4xf32, #tpu.memory_space<vmem>>, vector<1x1x8x8x4xf32>
    %174 = vector.shape_cast %173 : vector<1x1x8x8x4xf32> to vector<8x8x4xf32>
    %175 = vector.shape_cast %174 : vector<8x8x4xf32> to vector<64x4xf32>
    %176 = arith.truncf %175 : vector<64x4xf32> to vector<64x4xbf16>
    %c0_157 = arith.constant 0 : index
    %c0_158 = arith.constant 0 : index
    %177 = vector.load %arg8[%c0_157, %c0_158] : memref<4x8xf32, #tpu.memory_space<vmem>>, vector<4x8xf32>
    %178 = arith.truncf %177 : vector<4x8xf32> to vector<4x8xbf16>
    %cst_159 = arith.constant dense<0.000000e+00> : vector<64x8xf32>
    %179 = tpu.matmul %176, %178, %cst_159 {dimension_numbers = #tpu.dot_dimension_numbers<[1], [0], [0], [1], [0, 0, 1, 1], [], []>} : vector<64x4xbf16>, vector<4x8xbf16>, vector<64x8xf32> -> vector<64x8xf32>
    %c0_160 = arith.constant 0 : index
    %c0_161 = arith.constant 0 : index
    %180 = vector.load %arg9[%c0_160, %c0_161] : memref<1x8xf32, #tpu.memory_space<vmem>>, vector<1x8xf32>
    %181 = vector.broadcast %180 : vector<1x8xf32> to vector<64x8xf32>
    %182 = arith.mulf %179, %181 : vector<64x8xf32>
    %c0_162 = arith.constant 0 : index
    %c0_163 = arith.constant 0 : index
    %183 = vector.load %arg10[%c0_162, %c0_163] : memref<1x8xf32, #tpu.memory_space<vmem>>, vector<1x8xf32>
    %184 = vector.broadcast %183 : vector<1x8xf32> to vector<64x8xf32>
    %185 = arith.addf %182, %184 : vector<64x8xf32>
    %186 = arith.addf %172, %185 : vector<64x8xf32>
    %cst_164 = arith.constant 0.000000e+00 : f32
    %187 = vector.broadcast %cst_164 : f32 to vector<64x8xf32>
    %188 = arith.maximumf %186, %187 : vector<64x8xf32>
    %189 = vector.shape_cast %188 : vector<64x8xf32> to vector<8x8x8xf32>
    %c0_165 = arith.constant 0 : index
    %c0_166 = arith.constant 0 : index
    %c0_167 = arith.constant 0 : index
    %c0_168 = arith.constant 0 : index
    %190 = vector.load %arg11[%c0_165, %c0_166, %c0_167, %c0_168] : memref<1x8x8x8xf32, #tpu.memory_space<vmem>>, vector<1x8x8x8xf32>
    %191 = vector.shape_cast %190 : vector<1x8x8x8xf32> to vector<8x8x8xf32>
    %192 = vector.shape_cast %189 : vector<8x8x8xf32> to vector<1x8x8x8xf32>
    tpu.vector_store %arg11[%c0_165, %c0_166, %c0_167, %c0_168], %192 {strides = array<i32>} : memref<1x8x8x8xf32, #tpu.memory_space<vmem>>, vector<1x8x8x8xf32>,
    return
  }
  func.func @transform_0(%arg0: i32) -> (i32, i32, i32, i32, i32) {
    %c0_i32 = arith.constant 0 : i32
    %c0_i32_0 = arith.constant 0 : i32
    %c0_i32_1 = arith.constant 0 : i32
    %c0_i32_2 = arith.constant 0 : i32
    %c0_i32_3 = arith.constant 0 : i32
    return %arg0, %c0_i32, %c0_i32_0, %c0_i32_1, %c0_i32_2 : i32, i32, i32, i32, i32
  }
  func.func @transform_1(%arg0: i32) -> (i32, i32, i32) {
    %c0_i32 = arith.constant 0 : i32
    %c0_i32_0 = arith.constant 0 : i32
    %c0_i32_1 = arith.constant 0 : i32
    %c0_i32_2 = arith.constant 0 : i32
    return %c0_i32, %c0_i32_0, %c0_i32_1 : i32, i32, i32
  }
  func.func @transform_2(%arg0: i32) -> (i32, i32) {
    %c0_i32 = arith.constant 0 : i32
    %c0_i32_0 = arith.constant 0 : i32
    %c0_i32_1 = arith.constant 0 : i32
    return %c0_i32, %c0_i32_0 : i32, i32
  }
  func.func @transform_3(%arg0: i32) -> (i32, i32) {
    %c0_i32 = arith.constant 0 : i32
    %c0_i32_0 = arith.constant 0 : i32
    %c0_i32_1 = arith.constant 0 : i32
    return %c0_i32, %c0_i32_0 : i32, i32
  }
  func.func @transform_4(%arg0: i32) -> (i32, i32, i32) {
    %c0_i32 = arith.constant 0 : i32
    %c0_i32_0 = arith.constant 0 : i32
    %c0_i32_1 = arith.constant 0 : i32
    %c0_i32_2 = arith.constant 0 : i32
    return %c0_i32, %c0_i32_0, %c0_i32_1 : i32, i32, i32
  }
  func.func @transform_5(%arg0: i32) -> (i32, i32) {
    %c0_i32 = arith.constant 0 : i32
    %c0_i32_0 = arith.constant 0 : i32
    %c0_i32_1 = arith.constant 0 : i32
    return %c0_i32, %c0_i32_0 : i32, i32
  }
  func.func @transform_6(%arg0: i32) -> (i32, i32) {
    %c0_i32 = arith.constant 0 : i32
    %c0_i32_0 = arith.constant 0 : i32
    %c0_i32_1 = arith.constant 0 : i32
    return %c0_i32, %c0_i32_0 : i32, i32
  }
  func.func @transform_7(%arg0: i32) -> (i32, i32) {
    %c0_i32 = arith.constant 0 : i32
    %c0_i32_0 = arith.constant 0 : i32
    %c0_i32_1 = arith.constant 0 : i32
    return %c0_i32, %c0_i32_0 : i32, i32
  }
  func.func @transform_8(%arg0: i32) -> (i32, i32) {
    %c0_i32 = arith.constant 0 : i32
    %c0_i32_0 = arith.constant 0 : i32
    %c0_i32_1 = arith.constant 0 : i32
    return %c0_i32, %c0_i32_0 : i32, i32
  }
  func.func @transform_9(%arg0: i32) -> (i32, i32) {
    %c0_i32 = arith.constant 0 : i32
    %c0_i32_0 = arith.constant 0 : i32
    %c0_i32_1 = arith.constant 0 : i32
    return %c0_i32, %c0_i32_0 : i32, i32
  }
  func.func @transform_10(%arg0: i32) -> (i32, i32, i32, i32) {
    %c0_i32 = arith.constant 0 : i32
    %c0_i32_0 = arith.constant 0 : i32
    %c0_i32_1 = arith.constant 0 : i32
    %c0_i32_2 = arith.constant 0 : i32
    return %arg0, %c0_i32, %c0_i32_0, %c0_i32_1 : i32, i32, i32, i32
  }
}

</mosaic_0001>

<llo_original>
// kernel: tpu_custom_call.1
$region0: #{tpu_custom_call.1}
  #allocation0 [shape = 'u32[]', space=smem, size = 0x4, offset = 0x4, fixed_abs, tag = 'smem constant byte address 0x4 - core index']
  #allocation1 [shape = 'u32[72,128]{1,0:T(1,128)}', space=vmem, size = 0x9000, scoped, tag = 'internal scratch']
  #allocation2 [shape = 'f32[10,10,8]{2,1,0:T(8,128)}', space=vmem, size = 0x14000, scoped, tag = 'scratch operand']
  %s0 = inlined_call_operand.vmem [shape: f32[2,4,9,9,4], index: 0, kind: input, shape index: {}]
  %s1 = inlined_call_operand.vmem [shape: f32[9,4,8], index: 1, kind: input, shape index: {}]
  %s2 = inlined_call_operand.vmem [shape: f32[1,8], index: 2, kind: input, shape index: {}]
  %s3 = inlined_call_operand.vmem [shape: f32[1,8], index: 3, kind: input, shape index: {}]
  %s4 = inlined_call_operand.vmem [shape: f32[9,8,8], index: 4, kind: input, shape index: {}]
  %s5 = inlined_call_operand.vmem [shape: f32[1,8], index: 5, kind: input, shape index: {}]
  %s6 = inlined_call_operand.vmem [shape: f32[1,8], index: 6, kind: input, shape index: {}]
  %s7 = inlined_call_operand.vmem [shape: f32[4,8], index: 7, kind: input, shape index: {}]
  %s8 = inlined_call_operand.vmem [shape: f32[1,8], index: 8, kind: input, shape index: {}]
  %s9 = inlined_call_operand.vmem [shape: f32[1,8], index: 9, kind: input, shape index: {}]
  %s10 = inlined_call_operand.hbm [shape: f32[2,8,8,8], index: 10, kind: output, shape index: {}]
  %s11 = sld [smem:[#allocation0]]
  $region73: #{tpu_custom_call.1} parent=0
    _
  %s13 = ssub.s32 1, %s11
  %s14 = scalar_select 0, %s13, %s11
  $region1: #{tpu_custom_call.1} parent=0
    #allocation3 [shape = 'u8[65536]{0}', space=vmem, size = 0x10000, scoped, tag = 'output window, operand 0']
    #allocation4 [shape = 's32[2]{0}', space=sflag, size = 0x8, scoped, tag = 'scoped memory for tpu_custom_call.1']
    %15 = vsyncpa [#allocation4], 0
    %s16 = scalar_lea.sflag [#allocation4], 1
    %17 = vsyncpa %s16, 0
    loop: start=0, step=1, limit=4
    $region2: #{tpu_custom_call.1} parent=1 // loop_pre_header
      _
    $region3: #{tpu_custom_call.1} parent=1 // loop_header
      %s19 = sphi 0, %s23
      %p20 = scmp.ge.s32.totalorder %s19, 4
      %s29 = sphi 0, %s31
      %s32 = sphi 0, %s29
      %s33 = sphi 0, %s32
      %s49 = sphi 0, %s33
      %s53 = sphi 0, %s53
      %s55 = sphi 0, %s53
      %s56 = sphi 0, %s55
      %s70 = sphi 0, %s56
      %s74 = sphi 0, %s74
      %s76 = sphi 0, %s74
      %s77 = sphi 0, %s76
      %s91 = sphi 0, %s77
      %s95 = sphi 0, %s95
      %s97 = sphi 0, %s95
      %s98 = sphi 0, %s97
      %s112 = sphi 0, %s98
      %s116 = sphi 0, %s116
      %s118 = sphi 0, %s116
      %s119 = sphi 0, %s118
      %s133 = sphi 0, %s119
      %s137 = sphi 0, %s137
      %s139 = sphi 0, %s137
      %s140 = sphi 0, %s139
      %s154 = sphi 0, %s140
      %s158 = sphi 0, %s158
      %s160 = sphi 0, %s158
      %s161 = sphi 0, %s160
      %s175 = sphi 0, %s161
      %s179 = sphi 0, %s179
      %s181 = sphi 0, %s179
      %s182 = sphi 0, %s181
      %s196 = sphi 0, %s182
      %s200 = sphi 0, %s200
      %s202 = sphi 0, %s200
      %s203 = sphi 0, %s202
      %s217 = sphi 0, %s203
      %s221 = sphi 0, %s221
      %s223 = sphi 0, %s221
      %s224 = sphi 0, %s223
      %s238 = sphi 0, %s224
      %s244 = sphi 0, %s246
      %s247 = sphi 0, %s244
      %s248 = sphi 0, %s247
      %s264 = sphi 0, %s248
    $region4: #{tpu_custom_call.1} parent=1 // loop_header_branch
      %22 = sbr.rel (%p20) target = $region8
    $region5: #{tpu_custom_call.1} parent=1 // loop_body
      %s24 = ssub.s32 %s19, 1
      %s25 = ssub.s32 %s19, 2
      %s26 = sadd.s32 %s19, 1
      %s27 = ssub.s32 %s19, %s26
      %p28 = scmp.eq.s32.totalorder %s27, 0
      %s30 = sadd.s32 %s29, 1
      %s31 = scalar_select %p28, %s29, %s30
      %p34 = pneg %p28
      %p35 = scmp.eq.s32.totalorder %s19, 1
      %p36 = por %p34, %p35
      %p37 = scmp.ne.s32.totalorder %s29, %s32
      %p38 = scmp.eq.s32.totalorder %s19, 0
      %p39 = por %p37, %p38
      %p40 = scmp.ne.s32.totalorder %s29, %s32
      %p41 = scmp.eq.s32.totalorder %s24, 1
      %p42 = por %p40, %p41
      %p43 = scmp.ne.s32.totalorder %s32, %s33
      %p44 = scmp.eq.s32.totalorder %s24, 0
      %p45 = por %p43, %p44
      %p46 = scmp.ne.s32.totalorder %s32, %s33
      %p47 = scmp.eq.s32.totalorder %s25, 1
      %p48 = por %p46, %p47
      %p50 = scmp.ne.s32.totalorder %s33, %s49
      %p51 = scmp.eq.s32.totalorder %s25, 0
      %p52 = por %p50, %p51
      %s54 = sadd.s32 %s53, 1
      %p57 = scmp.eq.s32.totalorder %s19, 1
      %p58 = scmp.ne.s32.totalorder %s53, %s55
      %p59 = scmp.eq.s32.totalorder %s19, 0
      %p60 = por %p58, %p59
      %p61 = scmp.ne.s32.totalorder %s53, %s55
      %p62 = scmp.eq.s32.totalorder %s24, 1
      %p63 = por %p61, %p62
      %p64 = scmp.ne.s32.totalorder %s55, %s56
      %p65 = scmp.eq.s32.totalorder %s24, 0
      %p66 = por %p64, %p65
      %p67 = scmp.ne.s32.totalorder %s55, %s56
      %p68 = scmp.eq.s32.totalorder %s25, 1
      %p69 = por %p67, %p68
      %p71 = scmp.ne.s32.totalorder %s56, %s70
      %p72 = scmp.eq.s32.totalorder %s25, 0
      %p73 = por %p71, %p72
      %s75 = sadd.s32 %s74, 1
      %p78 = scmp.eq.s32.totalorder %s19, 1
      %p79 = scmp.ne.s32.totalorder %s74, %s76
      %p80 = scmp.eq.s32.totalorder %s19, 0
      %p81 = por %p79, %p80
      %p82 = scmp.ne.s32.totalorder %s74, %s76
      %p83 = scmp.eq.s32.totalorder %s24, 1
      %p84 = por %p82, %p83
      %p85 = scmp.ne.s32.totalorder %s76, %s77
      %p86 = scmp.eq.s32.totalorder %s24, 0
      %p87 = por %p85, %p86
      %p88 = scmp.ne.s32.totalorder %s76, %s77
      %p89 = scmp.eq.s32.totalorder %s25, 1
      %p90 = por %p88, %p89
      %p92 = scmp.ne.s32.totalorder %s77, %s91
      %p93 = scmp.eq.s32.totalorder %s25, 0
      %p94 = por %p92, %p93
      %s96 = sadd.s32 %s95, 1
      %p99 = scmp.eq.s32.totalorder %s19, 1
      %p100 = scmp.ne.s32.totalorder %s95, %s97
      %p101 = scmp.eq.s32.totalorder %s19, 0
      %p102 = por %p100, %p101
      %p103 = scmp.ne.s32.totalorder %s95, %s97
      %p104 = scmp.eq.s32.totalorder %s24, 1
      %p105 = por %p103, %p104
      %p106 = scmp.ne.s32.totalorder %s97, %s98
      %p107 = scmp.eq.s32.totalorder %s24, 0
      %p108 = por %p106, %p107
      %p109 = scmp.ne.s32.totalorder %s97, %s98
      %p110 = scmp.eq.s32.totalorder %s25, 1
      %p111 = por %p109, %p110
      %p113 = scmp.ne.s32.totalorder %s98, %s112
      %p114 = scmp.eq.s32.totalorder %s25, 0
      %p115 = por %p113, %p114
      %s117 = sadd.s32 %s116, 1
      %p120 = scmp.eq.s32.totalorder %s19, 1
      %p121 = scmp.ne.s32.totalorder %s116, %s118
      %p122 = scmp.eq.s32.totalorder %s19, 0
      %p123 = por %p121, %p122
      %p124 = scmp.ne.s32.totalorder %s116, %s118
      %p125 = scmp.eq.s32.totalorder %s24, 1
      %p126 = por %p124, %p125
      %p127 = scmp.ne.s32.totalorder %s118, %s119
      %p128 = scmp.eq.s32.totalorder %s24, 0
      %p129 = por %p127, %p128
      %p130 = scmp.ne.s32.totalorder %s118, %s119
      %p131 = scmp.eq.s32.totalorder %s25, 1
      %p132 = por %p130, %p131
      %p134 = scmp.ne.s32.totalorder %s119, %s133
      %p135 = scmp.eq.s32.totalorder %s25, 0
      %p136 = por %p134, %p135
      %s138 = sadd.s32 %s137, 1
      %p141 = scmp.eq.s32.totalorder %s19, 1
      %p142 = scmp.ne.s32.totalorder %s137, %s139
      %p143 = scmp.eq.s32.totalorder %s19, 0
      %p144 = por %p142, %p143
      %p145 = scmp.ne.s32.totalorder %s137, %s139
      %p146 = scmp.eq.s32.totalorder %s24, 1
      %p147 = por %p145, %p146
      %p148 = scmp.ne.s32.totalorder %s139, %s140
      %p149 = scmp.eq.s32.totalorder %s24, 0
      %p150 = por %p148, %p149
      %p151 = scmp.ne.s32.totalorder %s139, %s140
      %p152 = scmp.eq.s32.totalorder %s25, 1
      %p153 = por %p151, %p152
      %p155 = scmp.ne.s32.totalorder %s140, %s154
      %p156 = scmp.eq.s32.totalorder %s25, 0
      %p157 = por %p155, %p156
      %s159 = sadd.s32 %s158, 1
      %p162 = scmp.eq.s32.totalorder %s19, 1
      %p163 = scmp.ne.s32.totalorder %s158, %s160
      %p164 = scmp.eq.s32.totalorder %s19, 0
      %p165 = por %p163, %p164
      %p166 = scmp.ne.s32.totalorder %s158, %s160
      %p167 = scmp.eq.s32.totalorder %s24, 1
      %p168 = por %p166, %p167
      %p169 = scmp.ne.s32.totalorder %s160, %s161
      %p170 = scmp.eq.s32.totalorder %s24, 0
      %p171 = por %p169, %p170
      %p172 = scmp.ne.s32.totalorder %s160, %s161
      %p173 = scmp.eq.s32.totalorder %s25, 1
      %p174 = por %p172, %p173
      %p176 = scmp.ne.s32.totalorder %s161, %s175
      %p177 = scmp.eq.s32.totalorder %s25, 0
      %p178 = por %p176, %p177
      %s180 = sadd.s32 %s179, 1
      %p183 = scmp.eq.s32.totalorder %s19, 1
      %p184 = scmp.ne.s32.totalorder %s179, %s181
      %p185 = scmp.eq.s32.totalorder %s19, 0
      %p186 = por %p184, %p185
      %p187 = scmp.ne.s32.totalorder %s179, %s181
      %p188 = scmp.eq.s32.totalorder %s24, 1
      %p189 = por %p187, %p188
      %p190 = scmp.ne.s32.totalorder %s181, %s182
      %p191 = scmp.eq.s32.totalorder %s24, 0
      %p192 = por %p190, %p191
      %p193 = scmp.ne.s32.totalorder %s181, %s182
      %p194 = scmp.eq.s32.totalorder %s25, 1
      %p195 = por %p193, %p194
      %p197 = scmp.ne.s32.totalorder %s182, %s196
      %p198 = scmp.eq.s32.totalorder %s25, 0
      %p199 = por %p197, %p198
      %s201 = sadd.s32 %s200, 1
      %p204 = scmp.eq.s32.totalorder %s19, 1
      %p205 = scmp.ne.s32.totalorder %s200, %s202
      %p206 = scmp.eq.s32.totalorder %s19, 0
      %p207 = por %p205, %p206
      %p208 = scmp.ne.s32.totalorder %s200, %s202
      %p209 = scmp.eq.s32.totalorder %s24, 1
      %p210 = por %p208, %p209
      %p211 = scmp.ne.s32.totalorder %s202, %s203
      %p212 = scmp.eq.s32.totalorder %s24, 0
      %p213 = por %p211, %p212
      %p214 = scmp.ne.s32.totalorder %s202, %s203
      %p215 = scmp.eq.s32.totalorder %s25, 1
      %p216 = por %p214, %p215
      %p218 = scmp.ne.s32.totalorder %s203, %s217
      %p219 = scmp.eq.s32.totalorder %s25, 0
      %p220 = por %p218, %p219
      %s222 = sadd.s32 %s221, 1
      %p225 = scmp.eq.s32.totalorder %s19, 1
      %p226 = scmp.ne.s32.totalorder %s221, %s223
      %p227 = scmp.eq.s32.totalorder %s19, 0
      %p228 = por %p226, %p227
      %p229 = scmp.ne.s32.totalorder %s221, %s223
      %p230 = scmp.eq.s32.totalorder %s24, 1
      %p231 = por %p229, %p230
      %p232 = scmp.ne.s32.totalorder %s223, %s224
      %p233 = scmp.eq.s32.totalorder %s24, 0
      %p234 = por %p232, %p233
      %p235 = scmp.ne.s32.totalorder %s223, %s224
      %p236 = scmp.eq.s32.totalorder %s25, 1
      %p237 = por %p235, %p236
      %p239 = scmp.ne.s32.totalorder %s224, %s238
      %p240 = scmp.eq.s32.totalorder %s25, 0
      %p241 = por %p239, %p240
      %s242 = ssub.s32 %s19, %s26
      %p243 = scmp.eq.s32.totalorder %s242, 0
      %s245 = sadd.s32 %s244, 1
      %s246 = scalar_select %p243, %s244, %s245
      %p249 = pneg %p243
      %p250 = scmp.eq.s32.totalorder %s19, 1
      %p251 = por %p249, %p250
      %p252 = scmp.ne.s32.totalorder %s244, %s247
      %p253 = scmp.eq.s32.totalorder %s19, 0
      %p254 = por %p252, %p253
      %p255 = scmp.ne.s32.totalorder %s244, %s247
      %p256 = scmp.eq.s32.totalorder %s24, 1
      %p257 = por %p255, %p256
      %p258 = scmp.ne.s32.totalorder %s247, %s248
      %p259 = scmp.eq.s32.totalorder %s24, 0
      %p260 = por %p258, %p259
      %p261 = scmp.ne.s32.totalorder %s247, %s248
      %p262 = scmp.eq.s32.totalorder %s25, 1
      %p263 = por %p261, %p262
      %p265 = scmp.ne.s32.totalorder %s248, %s264
      %p266 = scmp.eq.s32.totalorder %s25, 0
      %p267 = por %p265, %p266
      %p268 = scmp.le.s32.totalorder 1, %s19
      %p269 = scmp.lt.s32.totalorder %s19, 3
      %p270 = pnand %p268, %p269
      %p271 = pneg %p270
      // Predicated region
      $region9: #{tpu_custom_call.1} parent=5 // pred_check
        _
      $region10: #{tpu_custom_call.1} parent=5 // pred_check_branch
        %273 = sbr.rel (%p270) target = $region12
      $region11: #{tpu_custom_call.1} parent=5 // pred_region
        %s274 = ssub.s32 %s19, 1
        // Predicated region
        $region13: #{tpu_custom_call.1} parent=11 // pred_check
          %p275 = pneg %p66
        $region14: #{tpu_custom_call.1} parent=11 // pred_check_branch
          %277 = sbr.rel (%p275) target = $region16
        $region15: #{tpu_custom_call.1} parent=11 // pred_region
          _
        $region16: #{tpu_custom_call.1} parent=11 // pred_fallthru
          _
        // Predicated region
        $region17: #{tpu_custom_call.1} parent=11 // pred_check
          %p278 = pneg %p87
        $region18: #{tpu_custom_call.1} parent=11 // pred_check_branch
          %280 = sbr.rel (%p278) target = $region20
        $region19: #{tpu_custom_call.1} parent=11 // pred_region
          _
        $region20: #{tpu_custom_call.1} parent=11 // pred_fallthru
          _
        // Predicated region
        $region21: #{tpu_custom_call.1} parent=11 // pred_check
          %p281 = pneg %p108
        $region22: #{tpu_custom_call.1} parent=11 // pred_check_branch
          %283 = sbr.rel (%p281) target = $region24
        $region23: #{tpu_custom_call.1} parent=11 // pred_region
          _
        $region24: #{tpu_custom_call.1} parent=11 // pred_fallthru
          _
        // Predicated region
        $region25: #{tpu_custom_call.1} parent=11 // pred_check
          %p284 = pneg %p129
        $region26: #{tpu_custom_call.1} parent=11 // pred_check_branch
          %286 = sbr.rel (%p284) target = $region28
        $region27: #{tpu_custom_call.1} parent=11 // pred_region
          _
        $region28: #{tpu_custom_call.1} parent=11 // pred_fallthru
          _
        // Predicated region
        $region29: #{tpu_custom_call.1} parent=11 // pred_check
          %p287 = pneg %p150
        $region30: #{tpu_custom_call.1} parent=11 // pred_check_branch
          %289 = sbr.rel (%p287) target = $region32
        $region31: #{tpu_custom_call.1} parent=11 // pred_region
          _
        $region32: #{tpu_custom_call.1} parent=11 // pred_fallthru
          _
        // Predicated region
        $region33: #{tpu_custom_call.1} parent=11 // pred_check
          %p290 = pneg %p171
        $region34: #{tpu_custom_call.1} parent=11 // pred_check_branch
          %292 = sbr.rel (%p290) target = $region36
        $region35: #{tpu_custom_call.1} parent=11 // pred_region
          _
        $region36: #{tpu_custom_call.1} parent=11 // pred_fallthru
          _
        // Predicated region
        $region37: #{tpu_custom_call.1} parent=11 // pred_check
          %p293 = pneg %p192
        $region38: #{tpu_custom_call.1} parent=11 // pred_check_branch
          %295 = sbr.rel (%p293) target = $region40
        $region39: #{tpu_custom_call.1} parent=11 // pred_region
          _
        $region40: #{tpu_custom_call.1} parent=11 // pred_fallthru
          _
        // Predicated region
        $region41: #{tpu_custom_call.1} parent=11 // pred_check
          %p296 = pneg %p213
        $region42: #{tpu_custom_call.1} parent=11 // pred_check_branch
          %298 = sbr.rel (%p296) target = $region44
        $region43: #{tpu_custom_call.1} parent=11 // pred_region
          _
        $region44: #{tpu_custom_call.1} parent=11 // pred_fallthru
          _
        // Predicated region
        $region45: #{tpu_custom_call.1} parent=11 // pred_check
          %p299 = pneg %p234
        $region46: #{tpu_custom_call.1} parent=11 // pred_check_branch
          %301 = sbr.rel (%p299) target = $region48
        $region47: #{tpu_custom_call.1} parent=11 // pred_region
          _
        $region48: #{tpu_custom_call.1} parent=11 // pred_fallthru
          _
      $region12: #{tpu_custom_call.1} parent=5 // pred_fallthru
        _
      %p302 = scmp.lt.s32.totalorder %s19, 2
      // Predicated region
      $region49: #{tpu_custom_call.1} parent=5 // pred_check
        %p303 = pneg %p302
      $region50: #{tpu_custom_call.1} parent=5 // pred_check_branch
        %305 = sbr.rel (%p303) target = $region52
      $region51: #{tpu_custom_call.1} parent=5 // pred_region
        // Predicated region
        $region53: #{tpu_custom_call.1} parent=51 // pred_check
          %p306 = pneg %p39
        $region54: #{tpu_custom_call.1} parent=51 // pred_check_branch
          %308 = sbr.rel (%p306) target = $region56
        $region55: #{tpu_custom_call.1} parent=51 // pred_region
          %p309 = scmp.lt.s32.totalorder %s19, 1
          %s310 = scalar_select %p309, %s19, 1
          %s311 = smul.addr %s310, 72
          %s312 = smul.addr %s311, 8
          %s313 = scalar_lea.vmem %s0, %s312
        $region56: #{tpu_custom_call.1} parent=51 // pred_fallthru
          _
      $region52: #{tpu_custom_call.1} parent=5 // pred_fallthru
        _
      %p314 = scmp.le.s32.totalorder 1, %s19
      %p315 = scmp.lt.s32.totalorder %s19, 3
      %p316 = pnand %p314, %p315
      %p317 = pneg %p316
      // Predicated region
      $region57: #{tpu_custom_call.1} parent=5 // pred_check
        _
      $region58: #{tpu_custom_call.1} parent=5 // pred_check_branch
        %319 = sbr.rel (%p316) target = $region60
      $region59: #{tpu_custom_call.1} parent=5 // pred_region
        %s320 = ssub.s32 %s19, 1
        %p321 = scmp.lt.s32.totalorder %s24, 1
        %s322 = scalar_select %p321, %s24, 1
        %s323 = smul.addr %s322, 72
        %s324 = smul.addr %s323, 8
        %s325 = scalar_lea.vmem %s0, %s324
        %p326 = pneg %p45
        %p327 = pneg %p42
        %p328 = pneg %p66
        %p329 = pneg %p63
        %p330 = pneg %p87
        %p331 = pneg %p84
        %p332 = pneg %p108
        %p333 = pneg %p105
        %p334 = pneg %p129
        %p335 = pneg %p126
        %p336 = pneg %p150
        %p337 = pneg %p147
        %p338 = pneg %p171
        %p339 = pneg %p168
        %p340 = pneg %p192
        %p341 = pneg %p189
        %p342 = pneg %p213
        %p343 = pneg %p210
        %p344 = pneg %p234
        %p345 = pneg %p231
        %p346 = pneg %p260
        %p347 = pneg %p257
        %s348 = sand.u32 %s247, 1
        %s349 = scalar_lea.sflag [#allocation4], %s348
        %s350 = sand.u32 %s247, 1
        %s351 = smul.addr %s350, 64
        %s352 = scalar_lea.vmem [#allocation3], %s351
        %p353 = scmp.lt.s32.totalorder %s24, 1
        %s354 = scalar_select %p353, %s24, 1
        %s355 = smul.addr %s354, 72
        %s356 = smul.addr %s355, 8
        %s357 = scalar_lea.vmem %s0, %s356
        %v359 = vld [vmem:[%s357] sm:$0xff]
        %v360 = vld [vmem:[%s357 + $0x10] sm:$0xff]
        %v361 = vld [vmem:[%s357 + $0x20] sm:$0xff]
        %v362 = vld [vmem:[%s357 + $0x30] sm:$0xff]
        %v363 = vld [vmem:[%s357 + $0x40] sm:$0xff]
        %v364 = vld [vmem:[%s357 + $0x50] sm:$0xff]
        %v365 = vld [vmem:[%s357 + $0x60] sm:$0xff]
        %v366 = vld [vmem:[%s357 + $0x70] sm:$0xff]
        %v367 = vpack.c.bf16 %v360, %v359
        %v368 = vpack.c.bf16 %v362, %v361
        %v369 = vpack.c.bf16 %v364, %v363
        %v370 = vpack.c.bf16 %v366, %v365
        %v371 = vld [vmem:[%s1] sm:$0xf]
        %v372 = vpack.c.bf16 %v371, %v371
        %s373 = scalar_lea.vmem %s357, 144
        %v374 = vld [vmem:[%s373] sm:$0xff]
        %v375 = vld [vmem:[%s373 + $0x10] sm:$0xff]
        %v376 = vld [vmem:[%s373 + $0x20] sm:$0xff]
        %v377 = vld [vmem:[%s373 + $0x30] sm:$0xff]
        %v378 = vld [vmem:[%s373 + $0x40] sm:$0xff]
        %v379 = vld [vmem:[%s373 + $0x50] sm:$0xff]
        %v380 = vld [vmem:[%s373 + $0x60] sm:$0xff]
        %v381 = vld [vmem:[%s373 + $0x70] sm:$0xff]
        %v382 = vpack.c.bf16 %v375, %v374
        %v383 = vpack.c.bf16 %v377, %v376
        %v384 = vpack.c.bf16 %v379, %v378
        %v385 = vpack.c.bf16 %v381, %v380
        %s386 = scalar_lea.vmem %s1, 4
        %v387 = vld [vmem:[%s386] sm:$0xf]
        %v388 = vpack.c.bf16 %v387, %v387
        %vm389 = vcmask 31744
        %v391 = vsel %vm389, %v382, 0
        %v394 = vsel %vm389, %v383, 0
        %v397 = vsel %vm389, %v384, 0
        %v400 = vsel %vm389, %v385, 0
        %vm402 = vcmask 1041408
        %v404 = vsel %vm402, %v388, 0
        %406 = vmatpush.bf16.msra.mxu0 0
        %407 = vmatpush.bf16.msra.mxu0 0
        %408 = vmatpush.bf16.msra.mxu0 0
        %409 = vmatpush.bf16.msra.mxu0 0
        %410 = vmatpush.bf16.msra.mxu0 0
        %411 = vmatpush.bf16.msra.mxu0 0
        %412 = vmatpush.bf16.msra.mxu0 0
        %413 = vmatpush.bf16.msra.mxu0 %v404
        %414 = vmatmul.bf16.gmra.mxu0 %v391
        %v415 = vpop.f32.mrf.mxu0
        %v416 = vadd.f32 0.0, %v415
        %v417 = vpop.f32.mrf.mxu0
        %v418 = vadd.f32 0.0, %v417
        %419 = vmatmul.bf16.gmra.mxu0 %v394
        %v420 = vpop.f32.mrf.mxu0
        %v421 = vadd.f32 0.0, %v420
        %v422 = vpop.f32.mrf.mxu0
        %v423 = vadd.f32 0.0, %v422
        %424 = vmatmul.bf16.gmra.mxu0 %v397
        %v425 = vpop.f32.mrf.mxu0
        %v426 = vadd.f32 0.0, %v425
        %v427 = vpop.f32.mrf.mxu0
        %v428 = vadd.f32 0.0, %v427
        %429 = vmatmul.bf16.gmra.mxu0 %v400
        %v430 = vpop.f32.mrf.mxu0
        %v431 = vadd.f32 0.0, %v430
        %v432 = vpop.f32.mrf.mxu0
        %v433 = vadd.f32 0.0, %v432
        %434 = vdwg.mxu0
        %v436 = vsel %vm389, %v367, 0
        %v439 = vsel %vm389, %v368, 0
        %v442 = vsel %vm389, %v369, 0
        %v445 = vsel %vm389, %v370, 0
        %v448 = vsel %vm402, %v372, 0
        %450 = vmatpush.bf16.msra.mxu0 0
        %451 = vmatpush.bf16.msra.mxu0 0
        %452 = vmatpush.bf16.msra.mxu0 0
        %453 = vmatpush.bf16.msra.mxu0 0
        %454 = vmatpush.bf16.msra.mxu0 0
        %455 = vmatpush.bf16.msra.mxu0 0
        %456 = vmatpush.bf16.msra.mxu0 0
        %457 = vmatpush.bf16.msra.mxu0 %v448
        %458 = vmatmul.bf16.gmra.mxu0 %v436
        %v459 = vpop.f32.mrf.mxu0
        %v460 = vadd.f32 %v416, %v459
        %v461 = vpop.f32.mrf.mxu0
        %v462 = vadd.f32 %v418, %v461
        %463 = vmatmul.bf16.gmra.mxu0 %v439
        %v464 = vpop.f32.mrf.mxu0
        %v465 = vadd.f32 %v421, %v464
        %v466 = vpop.f32.mrf.mxu0
        %v467 = vadd.f32 %v423, %v466
        %468 = vmatmul.bf16.gmra.mxu0 %v442
        %v469 = vpop.f32.mrf.mxu0
        %v470 = vadd.f32 %v426, %v469
        %v471 = vpop.f32.mrf.mxu0
        %v472 = vadd.f32 %v428, %v471
        %473 = vmatmul.bf16.gmra.mxu0 %v445
        %v474 = vpop.f32.mrf.mxu0
        %v475 = vadd.f32 %v431, %v474
        %v476 = vpop.f32.mrf.mxu0
        %v477 = vadd.f32 %v433, %v476
        %478 = vdwg.mxu0
        %v479 = vld [vmem:[%s357 + $0x1] sm:$0xff]
        %v480 = vld [vmem:[%s357 + $0x11] sm:$0xff]
        %v481 = vld [vmem:[%s357 + $0x21] sm:$0xff]
        %v482 = vld [vmem:[%s357 + $0x31] sm:$0xff]
        %v483 = vld [vmem:[%s357 + $0x41] sm:$0xff]
        %v484 = vld [vmem:[%s357 + $0x51] sm:$0xff]
        %v485 = vld [vmem:[%s357 + $0x61] sm:$0xff]
        %v486 = vld [vmem:[%s357 + $0x71] sm:$0xff]
        %v487 = vpack.c.bf16 %v480, %v479
        %v488 = vpack.c.bf16 %v482, %v481
        %v489 = vpack.c.bf16 %v484, %v483
        %v490 = vpack.c.bf16 %v486, %v485
        %s491 = scalar_lea.vmem %s1, 8
        %v492 = vld [vmem:[%s491] sm:$0xf]
        %v493 = vpack.c.bf16 %v492, %v492
        %v495 = vsel %vm389, %v487, 0
        %v498 = vsel %vm389, %v488, 0
        %v501 = vsel %vm389, %v489, 0
        %v504 = vsel %vm389, %v490, 0
        %v507 = vsel %vm402, %v493, 0
        %509 = vmatpush.bf16.msra.mxu0 0
        %510 = vmatpush.bf16.msra.mxu0 0
        %511 = vmatpush.bf16.msra.mxu0 0
        %512 = vmatpush.bf16.msra.mxu0 0
        %513 = vmatpush.bf16.msra.mxu0 0
        %514 = vmatpush.bf16.msra.mxu0 0
        %515 = vmatpush.bf16.msra.mxu0 0
        %516 = vmatpush.bf16.msra.mxu0 %v507
        %517 = vmatmul.bf16.gmra.mxu0 %v495
        %v518 = vpop.f32.mrf.mxu0
        %v519 = vadd.f32 0.0, %v518
        %v520 = vpop.f32.mrf.mxu0
        %v521 = vadd.f32 0.0, %v520
        %522 = vmatmul.bf16.gmra.mxu0 %v498
        %v523 = vpop.f32.mrf.mxu0
        %v524 = vadd.f32 0.0, %v523
        %v525 = vpop.f32.mrf.mxu0
        %v526 = vadd.f32 0.0, %v525
        %527 = vmatmul.bf16.gmra.mxu0 %v501
        %v528 = vpop.f32.mrf.mxu0
        %v529 = vadd.f32 0.0, %v528
        %v530 = vpop.f32.mrf.mxu0
        %v531 = vadd.f32 0.0, %v530
        %532 = vmatmul.bf16.gmra.mxu0 %v504
        %v533 = vpop.f32.mrf.mxu0
        %v534 = vadd.f32 0.0, %v533
        %v535 = vpop.f32.mrf.mxu0
        %v536 = vadd.f32 0.0, %v535
        %537 = vdwg.mxu0
        %v538 = vadd.f32 %v460, %v519
        %v539 = vadd.f32 %v462, %v521
        %v540 = vadd.f32 %v465, %v524
        %v541 = vadd.f32 %v467, %v526
        %v542 = vadd.f32 %v470, %v529
        %v543 = vadd.f32 %v472, %v531
        %v544 = vadd.f32 %v475, %v534
        %v545 = vadd.f32 %v477, %v536
        %s546 = scalar_lea.vmem %s357, 288
        %v547 = vld [vmem:[%s546] sm:$0xff]
        %v548 = vld [vmem:[%s546 + $0x10] sm:$0xff]
        %v549 = vld [vmem:[%s546 + $0x20] sm:$0xff]
        %v550 = vld [vmem:[%s546 + $0x30] sm:$0xff]
        %v551 = vld [vmem:[%s546 + $0x40] sm:$0xff]
        %v552 = vld [vmem:[%s546 + $0x50] sm:$0xff]
        %v553 = vld [vmem:[%s546 + $0x60] sm:$0xff]
        %v554 = vld [vmem:[%s546 + $0x70] sm:$0xff]
        %v555 = vpack.c.bf16 %v548, %v547
        %v556 = vpack.c.bf16 %v550, %v549
        %v557 = vpack.c.bf16 %v552, %v551
        %v558 = vpack.c.bf16 %v554, %v553
        %s559 = scalar_lea.vmem %s1, 12
        %v560 = vld [vmem:[%s559] sm:$0xf]
        %v561 = vpack.c.bf16 %v560, %v560
        %v563 = vsel %vm389, %v555, 0
        %v566 = vsel %vm389, %v556, 0
        %v569 = vsel %vm389, %v557, 0
        %v572 = vsel %vm389, %v558, 0
        %v575 = vsel %vm402, %v561, 0
        %577 = vmatpush.bf16.msra.mxu0 0
        %578 = vmatpush.bf16.msra.mxu0 0
        %579 = vmatpush.bf16.msra.mxu0 0
        %580 = vmatpush.bf16.msra.mxu0 0
        %581 = vmatpush.bf16.msra.mxu0 0
        %582 = vmatpush.bf16.msra.mxu0 0
        %583 = vmatpush.bf16.msra.mxu0 0
        %584 = vmatpush.bf16.msra.mxu0 %v575
        %585 = vmatmul.bf16.gmra.mxu0 %v563
        %v586 = vpop.f32.mrf.mxu0
        %v587 = vadd.f32 0.0, %v586
        %v588 = vpop.f32.mrf.mxu0
        %v589 = vadd.f32 0.0, %v588
        %590 = vmatmul.bf16.gmra.mxu0 %v566
        %v591 = vpop.f32.mrf.mxu0
        %v592 = vadd.f32 0.0, %v591
        %v593 = vpop.f32.mrf.mxu0
        %v594 = vadd.f32 0.0, %v593
        %595 = vmatmul.bf16.gmra.mxu0 %v569
        %v596 = vpop.f32.mrf.mxu0
        %v597 = vadd.f32 0.0, %v596
        %v598 = vpop.f32.mrf.mxu0
        %v599 = vadd.f32 0.0, %v598
        %600 = vmatmul.bf16.gmra.mxu0 %v572
        %v601 = vpop.f32.mrf.mxu0
        %v602 = vadd.f32 0.0, %v601
        %v603 = vpop.f32.mrf.mxu0
        %v604 = vadd.f32 0.0, %v603
        %605 = vdwg.mxu0
        %v606 = vadd.f32 %v538, %v587
        %v607 = vadd.f32 %v539, %v589
        %v608 = vadd.f32 %v540, %v592
        %v609 = vadd.f32 %v541, %v594
        %v610 = vadd.f32 %v542, %v597
        %v611 = vadd.f32 %v543, %v599
        %v612 = vadd.f32 %v544, %v602
        %v613 = vadd.f32 %v545, %v604
        %s614 = scalar_lea.vmem %s357, 432
        %v615 = vld [vmem:[%s614] sm:$0xff]
        %v616 = vld [vmem:[%s614 + $0x10] sm:$0xff]
        %v617 = vld [vmem:[%s614 + $0x20] sm:$0xff]
        %v618 = vld [vmem:[%s614 + $0x30] sm:$0xff]
        %v619 = vld [vmem:[%s614 + $0x40] sm:$0xff]
        %v620 = vld [vmem:[%s614 + $0x50] sm:$0xff]
        %v621 = vld [vmem:[%s614 + $0x60] sm:$0xff]
        %v622 = vld [vmem:[%s614 + $0x70] sm:$0xff]
        %v623 = vpack.c.bf16 %v616, %v615
        %v624 = vpack.c.bf16 %v618, %v617
        %v625 = vpack.c.bf16 %v620, %v619
        %v626 = vpack.c.bf16 %v622, %v621
        %s627 = scalar_lea.vmem %s1, 16
        %v628 = vld [vmem:[%s627] sm:$0xf]
        %v629 = vpack.c.bf16 %v628, %v628
        %v631 = vsel %vm389, %v623, 0
        %v634 = vsel %vm389, %v624, 0
        %v637 = vsel %vm389, %v625, 0
        %v640 = vsel %vm389, %v626, 0
        %v643 = vsel %vm402, %v629, 0
        %645 = vmatpush.bf16.msra.mxu0 0
        %646 = vmatpush.bf16.msra.mxu0 0
        %647 = vmatpush.bf16.msra.mxu0 0
        %648 = vmatpush.bf16.msra.mxu0 0
        %649 = vmatpush.bf16.msra.mxu0 0
        %650 = vmatpush.bf16.msra.mxu0 0
        %651 = vmatpush.bf16.msra.mxu0 0
        %652 = vmatpush.bf16.msra.mxu0 %v643
        %653 = vmatmul.bf16.gmra.mxu0 %v631
        %v654 = vpop.f32.mrf.mxu0
        %v655 = vadd.f32 0.0, %v654
        %v656 = vpop.f32.mrf.mxu0
        %v657 = vadd.f32 0.0, %v656
        %658 = vmatmul.bf16.gmra.mxu0 %v634
        %v659 = vpop.f32.mrf.mxu0
        %v660 = vadd.f32 0.0, %v659
        %v661 = vpop.f32.mrf.mxu0
        %v662 = vadd.f32 0.0, %v661
        %663 = vmatmul.bf16.gmra.mxu0 %v637
        %v664 = vpop.f32.mrf.mxu0
        %v665 = vadd.f32 0.0, %v664
        %v666 = vpop.f32.mrf.mxu0
        %v667 = vadd.f32 0.0, %v666
        %668 = vmatmul.bf16.gmra.mxu0 %v640
        %v669 = vpop.f32.mrf.mxu0
        %v670 = vadd.f32 0.0, %v669
        %v671 = vpop.f32.mrf.mxu0
        %v672 = vadd.f32 0.0, %v671
        %673 = vdwg.mxu0
        %v674 = vadd.f32 %v606, %v655
        %v675 = vadd.f32 %v607, %v657
        %v676 = vadd.f32 %v608, %v660
        %v677 = vadd.f32 %v609, %v662
        %v678 = vadd.f32 %v610, %v665
        %v679 = vadd.f32 %v611, %v667
        %v680 = vadd.f32 %v612, %v670
        %v681 = vadd.f32 %v613, %v672
        %v682 = vld [vmem:[%s546 + $0x1] sm:$0xff]
        %v683 = vld [vmem:[%s546 + $0x11] sm:$0xff]
        %v684 = vld [vmem:[%s546 + $0x21] sm:$0xff]
        %v685 = vld [vmem:[%s546 + $0x31] sm:$0xff]
        %v686 = vld [vmem:[%s546 + $0x41] sm:$0xff]
        %v687 = vld [vmem:[%s546 + $0x51] sm:$0xff]
        %v688 = vld [vmem:[%s546 + $0x61] sm:$0xff]
        %v689 = vld [vmem:[%s546 + $0x71] sm:$0xff]
        %v690 = vpack.c.bf16 %v683, %v682
        %v691 = vpack.c.bf16 %v685, %v684
        %v692 = vpack.c.bf16 %v687, %v686
        %v693 = vpack.c.bf16 %v689, %v688
        %s694 = scalar_lea.vmem %s1, 20
        %v695 = vld [vmem:[%s694] sm:$0xf]
        %v696 = vpack.c.bf16 %v695, %v695
        %v698 = vsel %vm389, %v690, 0
        %v701 = vsel %vm389, %v691, 0
        %v704 = vsel %vm389, %v692, 0
        %v707 = vsel %vm389, %v693, 0
        %v710 = vsel %vm402, %v696, 0
        %712 = vmatpush.bf16.msra.mxu0 0
        %713 = vmatpush.bf16.msra.mxu0 0
        %714 = vmatpush.bf16.msra.mxu0 0
        %715 = vmatpush.bf16.msra.mxu0 0
        %716 = vmatpush.bf16.msra.mxu0 0
        %717 = vmatpush.bf16.msra.mxu0 0
        %718 = vmatpush.bf16.msra.mxu0 0
        %719 = vmatpush.bf16.msra.mxu0 %v710
        %720 = vmatmul.bf16.gmra.mxu0 %v698
        %v721 = vpop.f32.mrf.mxu0
        %v722 = vadd.f32 0.0, %v721
        %v723 = vpop.f32.mrf.mxu0
        %v724 = vadd.f32 0.0, %v723
        %725 = vmatmul.bf16.gmra.mxu0 %v701
        %v726 = vpop.f32.mrf.mxu0
        %v727 = vadd.f32 0.0, %v726
        %v728 = vpop.f32.mrf.mxu0
        %v729 = vadd.f32 0.0, %v728
        %730 = vmatmul.bf16.gmra.mxu0 %v704
        %v731 = vpop.f32.mrf.mxu0
        %v732 = vadd.f32 0.0, %v731
        %v733 = vpop.f32.mrf.mxu0
        %v734 = vadd.f32 0.0, %v733
        %735 = vmatmul.bf16.gmra.mxu0 %v707
        %v736 = vpop.f32.mrf.mxu0
        %v737 = vadd.f32 0.0, %v736
        %v738 = vpop.f32.mrf.mxu0
        %v739 = vadd.f32 0.0, %v738
        %740 = vdwg.mxu0
        %v741 = vadd.f32 %v674, %v722
        %v742 = vadd.f32 %v675, %v724
        %v743 = vadd.f32 %v676, %v727
        %v744 = vadd.f32 %v677, %v729
        %v745 = vadd.f32 %v678, %v732
        %v746 = vadd.f32 %v679, %v734
        %v747 = vadd.f32 %v680, %v737
        %v748 = vadd.f32 %v681, %v739
        %s749 = scalar_lea.vmem %s357, 16
        %v750 = vld [vmem:[%s749] sm:$0xff]
        %v751 = vld [vmem:[%s749 + $0x10] sm:$0xff]
        %v752 = vld [vmem:[%s749 + $0x20] sm:$0xff]
        %v753 = vld [vmem:[%s749 + $0x30] sm:$0xff]
        %v754 = vld [vmem:[%s749 + $0x40] sm:$0xff]
        %v755 = vld [vmem:[%s749 + $0x50] sm:$0xff]
        %v756 = vld [vmem:[%s749 + $0x60] sm:$0xff]
        %v757 = vld [vmem:[%s749 + $0x70] sm:$0xff]
        %v758 = vpack.c.bf16 %v751, %v750
        %v759 = vpack.c.bf16 %v753, %v752
        %v760 = vpack.c.bf16 %v755, %v754
        %v761 = vpack.c.bf16 %v757, %v756
        %s762 = scalar_lea.vmem %s1, 24
        %v763 = vld [vmem:[%s762] sm:$0xf]
        %v764 = vpack.c.bf16 %v763, %v763
        %v766 = vsel %vm389, %v758, 0
        %v769 = vsel %vm389, %v759, 0
        %v772 = vsel %vm389, %v760, 0
        %v775 = vsel %vm389, %v761, 0
        %v778 = vsel %vm402, %v764, 0
        %780 = vmatpush.bf16.msra.mxu0 0
        %781 = vmatpush.bf16.msra.mxu0 0
        %782 = vmatpush.bf16.msra.mxu0 0
        %783 = vmatpush.bf16.msra.mxu0 0
        %784 = vmatpush.bf16.msra.mxu0 0
        %785 = vmatpush.bf16.msra.mxu0 0
        %786 = vmatpush.bf16.msra.mxu0 0
        %787 = vmatpush.bf16.msra.mxu0 %v778
        %788 = vmatmul.bf16.gmra.mxu0 %v766
        %v789 = vpop.f32.mrf.mxu0
        %v790 = vadd.f32 0.0, %v789
        %v791 = vpop.f32.mrf.mxu0
        %v792 = vadd.f32 0.0, %v791
        %793 = vmatmul.bf16.gmra.mxu0 %v769
        %v794 = vpop.f32.mrf.mxu0
        %v795 = vadd.f32 0.0, %v794
        %v796 = vpop.f32.mrf.mxu0
        %v797 = vadd.f32 0.0, %v796
        %798 = vmatmul.bf16.gmra.mxu0 %v772
        %v799 = vpop.f32.mrf.mxu0
        %v800 = vadd.f32 0.0, %v799
        %v801 = vpop.f32.mrf.mxu0
        %v802 = vadd.f32 0.0, %v801
        %803 = vmatmul.bf16.gmra.mxu0 %v775
        %v804 = vpop.f32.mrf.mxu0
        %v805 = vadd.f32 0.0, %v804
        %v806 = vpop.f32.mrf.mxu0
        %v807 = vadd.f32 0.0, %v806
        %808 = vdwg.mxu0
        %v809 = vadd.f32 %v741, %v790
        %v810 = vadd.f32 %v742, %v792
        %v811 = vadd.f32 %v743, %v795
        %v812 = vadd.f32 %v744, %v797
        %v813 = vadd.f32 %v745, %v800
        %v814 = vadd.f32 %v746, %v802
        %v815 = vadd.f32 %v747, %v805
        %v816 = vadd.f32 %v748, %v807
        %s817 = scalar_lea.vmem %s357, 160
        %v818 = vld [vmem:[%s817] sm:$0xff]
        %v819 = vld [vmem:[%s817 + $0x10] sm:$0xff]
        %v820 = vld [vmem:[%s817 + $0x20] sm:$0xff]
        %v821 = vld [vmem:[%s817 + $0x30] sm:$0xff]
        %v822 = vld [vmem:[%s817 + $0x40] sm:$0xff]
        %v823 = vld [vmem:[%s817 + $0x50] sm:$0xff]
        %v824 = vld [vmem:[%s817 + $0x60] sm:$0xff]
        %v825 = vld [vmem:[%s817 + $0x70] sm:$0xff]
        %v826 = vpack.c.bf16 %v819, %v818
        %v827 = vpack.c.bf16 %v821, %v820
        %v828 = vpack.c.bf16 %v823, %v822
        %v829 = vpack.c.bf16 %v825, %v824
        %s830 = scalar_lea.vmem %s1, 28
        %v831 = vld [vmem:[%s830] sm:$0xf]
        %v832 = vpack.c.bf16 %v831, %v831
        %v834 = vsel %vm389, %v826, 0
        %v837 = vsel %vm389, %v827, 0
        %v840 = vsel %vm389, %v828, 0
        %v843 = vsel %vm389, %v829, 0
        %v846 = vsel %vm402, %v832, 0
        %848 = vmatpush.bf16.msra.mxu0 0
        %849 = vmatpush.bf16.msra.mxu0 0
        %850 = vmatpush.bf16.msra.mxu0 0
        %851 = vmatpush.bf16.msra.mxu0 0
        %852 = vmatpush.bf16.msra.mxu0 0
        %853 = vmatpush.bf16.msra.mxu0 0
        %854 = vmatpush.bf16.msra.mxu0 0
        %855 = vmatpush.bf16.msra.mxu0 %v846
        %856 = vmatmul.bf16.gmra.mxu0 %v834
        %v857 = vpop.f32.mrf.mxu0
        %v858 = vadd.f32 0.0, %v857
        %v859 = vpop.f32.mrf.mxu0
        %v860 = vadd.f32 0.0, %v859
        %861 = vmatmul.bf16.gmra.mxu0 %v837
        %v862 = vpop.f32.mrf.mxu0
        %v863 = vadd.f32 0.0, %v862
        %v864 = vpop.f32.mrf.mxu0
        %v865 = vadd.f32 0.0, %v864
        %866 = vmatmul.bf16.gmra.mxu0 %v840
        %v867 = vpop.f32.mrf.mxu0
        %v868 = vadd.f32 0.0, %v867
        %v869 = vpop.f32.mrf.mxu0
        %v870 = vadd.f32 0.0, %v869
        %871 = vmatmul.bf16.gmra.mxu0 %v843
        %v872 = vpop.f32.mrf.mxu0
        %v873 = vadd.f32 0.0, %v872
        %v874 = vpop.f32.mrf.mxu0
        %v875 = vadd.f32 0.0, %v874
        %876 = vdwg.mxu0
        %v877 = vadd.f32 %v809, %v858
        %v878 = vadd.f32 %v810, %v860
        %v879 = vadd.f32 %v811, %v863
        %v880 = vadd.f32 %v812, %v865
        %v881 = vadd.f32 %v813, %v868
        %v882 = vadd.f32 %v814, %v870
        %v883 = vadd.f32 %v815, %v873
        %v884 = vadd.f32 %v816, %v875
        %v885 = vld [vmem:[%s749 + $0x1] sm:$0xff]
        %v886 = vld [vmem:[%s749 + $0x11] sm:$0xff]
        %v887 = vld [vmem:[%s749 + $0x21] sm:$0xff]
        %v888 = vld [vmem:[%s749 + $0x31] sm:$0xff]
        %v889 = vld [vmem:[%s749 + $0x41] sm:$0xff]
        %v890 = vld [vmem:[%s749 + $0x51] sm:$0xff]
        %v891 = vld [vmem:[%s749 + $0x61] sm:$0xff]
        %v892 = vld [vmem:[%s749 + $0x71] sm:$0xff]
        %v893 = vpack.c.bf16 %v886, %v885
        %v894 = vpack.c.bf16 %v888, %v887
        %v895 = vpack.c.bf16 %v890, %v889
        %v896 = vpack.c.bf16 %v892, %v891
        %s897 = scalar_lea.vmem %s1, 32
        %v898 = vld [vmem:[%s897] sm:$0xf]
        %v899 = vpack.c.bf16 %v898, %v898
        %v901 = vsel %vm389, %v893, 0
        %v904 = vsel %vm389, %v894, 0
        %v907 = vsel %vm389, %v895, 0
        %v910 = vsel %vm389, %v896, 0
        %v913 = vsel %vm402, %v899, 0
        %915 = vmatpush.bf16.msra.mxu0 0
        %916 = vmatpush.bf16.msra.mxu0 0
        %917 = vmatpush.bf16.msra.mxu0 0
        %918 = vmatpush.bf16.msra.mxu0 0
        %919 = vmatpush.bf16.msra.mxu0 0
        %920 = vmatpush.bf16.msra.mxu0 0
        %921 = vmatpush.bf16.msra.mxu0 0
        %922 = vmatpush.bf16.msra.mxu0 %v913
        %923 = vmatmul.bf16.gmra.mxu0 %v901
        %v924 = vpop.f32.mrf.mxu0
        %v925 = vadd.f32 0.0, %v924
        %v926 = vpop.f32.mrf.mxu0
        %v927 = vadd.f32 0.0, %v926
        %928 = vmatmul.bf16.gmra.mxu0 %v904
        %v929 = vpop.f32.mrf.mxu0
        %v930 = vadd.f32 0.0, %v929
        %v931 = vpop.f32.mrf.mxu0
        %v932 = vadd.f32 0.0, %v931
        %933 = vmatmul.bf16.gmra.mxu0 %v907
        %v934 = vpop.f32.mrf.mxu0
        %v935 = vadd.f32 0.0, %v934
        %v936 = vpop.f32.mrf.mxu0
        %v937 = vadd.f32 0.0, %v936
        %938 = vmatmul.bf16.gmra.mxu0 %v910
        %v939 = vpop.f32.mrf.mxu0
        %v940 = vadd.f32 0.0, %v939
        %v941 = vpop.f32.mrf.mxu0
        %v942 = vadd.f32 0.0, %v941
        %943 = vdwg.mxu0
        %v944 = vadd.f32 %v877, %v925
        %v945 = vadd.f32 %v878, %v927
        %v946 = vadd.f32 %v879, %v930
        %v947 = vadd.f32 %v880, %v932
        %v948 = vadd.f32 %v881, %v935
        %v949 = vadd.f32 %v882, %v937
        %v950 = vadd.f32 %v883, %v940
        %v951 = vadd.f32 %v884, %v942
        %v952 = vld [vmem:[%s2] sm:$0x1]
        %v954 = vperm.slane %v952, 0
        %v956 = vmul.f32 %v944, %v954
        %v957 = vmul.f32 %v945, %v954
        %v958 = vmul.f32 %v946, %v954
        %v959 = vmul.f32 %v947, %v954
        %v960 = vmul.f32 %v948, %v954
        %v961 = vmul.f32 %v949, %v954
        %v962 = vmul.f32 %v950, %v954
        %v963 = vmul.f32 %v951, %v954
        %v964 = vld [vmem:[%s3] sm:$0x1]
        %v966 = vperm.slane %v964, 0
        %v968 = vadd.f32 %v956, %v966
        %v969 = vadd.f32 %v957, %v966
        %v970 = vadd.f32 %v958, %v966
        %v971 = vadd.f32 %v959, %v966
        %v972 = vadd.f32 %v960, %v966
        %v973 = vadd.f32 %v961, %v966
        %v974 = vadd.f32 %v962, %v966
        %v975 = vadd.f32 %v963, %v966
        %v976 = vmax.f32 %v968, 0.0
        %v977 = vmax.f32 %v969, 0.0
        %v978 = vmax.f32 %v970, 0.0
        %v979 = vmax.f32 %v971, 0.0
        %v980 = vmax.f32 %v972, 0.0
        %v981 = vmax.f32 %v973, 0.0
        %v982 = vmax.f32 %v974, 0.0
        %v983 = vmax.f32 %v975, 0.0
        %vm984 = vcmask 64512
        %985 = vst.msk [vmem:[#allocation2] sm:$0xff] %vm984, 0.0
        %vm986 = vcmask 58368
        %987 = vst.msk [vmem:[#allocation2 + $0x8] sm:$0x3] %vm986, 0.0
        %988 = vst.msk [vmem:[#allocation2 + $0x10] sm:$0xff] %vm984, 0.0
        %989 = vst.msk [vmem:[#allocation2 + $0x18] sm:$0x3] %vm986, 0.0
        %990 = vst.msk [vmem:[#allocation2 + $0x20] sm:$0xff] %vm984, 0.0
        %991 = vst.msk [vmem:[#allocation2 + $0x28] sm:$0x3] %vm986, 0.0
        %992 = vst.msk [vmem:[#allocation2 + $0x30] sm:$0xff] %vm984, 0.0
        %993 = vst.msk [vmem:[#allocation2 + $0x38] sm:$0x3] %vm986, 0.0
        %994 = vst.msk [vmem:[#allocation2 + $0x40] sm:$0xff] %vm984, 0.0
        %995 = vst.msk [vmem:[#allocation2 + $0x48] sm:$0x3] %vm986, 0.0
        %996 = vst.msk [vmem:[#allocation2 + $0x50] sm:$0xff] %vm984, 0.0
        %997 = vst.msk [vmem:[#allocation2 + $0x58] sm:$0x3] %vm986, 0.0
        %998 = vst.msk [vmem:[#allocation2 + $0x60] sm:$0xff] %vm984, 0.0
        %999 = vst.msk [vmem:[#allocation2 + $0x68] sm:$0x3] %vm986, 0.0
        %1000 = vst.msk [vmem:[#allocation2 + $0x70] sm:$0xff] %vm984, 0.0
        %1001 = vst.msk [vmem:[#allocation2 + $0x78] sm:$0x3] %vm986, 0.0
        %1002 = vst.msk [vmem:[#allocation2 + $0x80] sm:$0xff] %vm984, 0.0
        %1003 = vst.msk [vmem:[#allocation2 + $0x88] sm:$0x3] %vm986, 0.0
        %1004 = vst.msk [vmem:[#allocation2 + $0x90] sm:$0xff] %vm984, 0.0
        %1005 = vst.msk [vmem:[#allocation2 + $0x98] sm:$0x3] %vm986, 0.0
        %s1006 = scalar_lea.vmem [#allocation2], 16
        %1007 = vst.msk [vmem:[%s1006 + $0x1] sm:$0xff] %vm984, %v976
        %1008 = vst.msk [vmem:[%s1006 + $0x11] sm:$0xff] %vm984, %v977
        %1009 = vst.msk [vmem:[%s1006 + $0x21] sm:$0xff] %vm984, %v978
        %1010 = vst.msk [vmem:[%s1006 + $0x31] sm:$0xff] %vm984, %v979
        %1011 = vst.msk [vmem:[%s1006 + $0x41] sm:$0xff] %vm984, %v980
        %1012 = vst.msk [vmem:[%s1006 + $0x51] sm:$0xff] %vm984, %v981
        %1013 = vst.msk [vmem:[%s1006 + $0x61] sm:$0xff] %vm984, %v982
        %1014 = vst.msk [vmem:[%s1006 + $0x71] sm:$0xff] %vm984, %v983
        %v1015 = vld [vmem:[#allocation2] sm:$0xff]
        %v1016 = vld [vmem:[#allocation2 + $0x10] sm:$0xff]
        %v1017 = vld [vmem:[#allocation2 + $0x20] sm:$0xff]
        %v1018 = vld [vmem:[#allocation2 + $0x30] sm:$0xff]
        %v1019 = vld [vmem:[#allocation2 + $0x40] sm:$0xff]
        %v1020 = vld [vmem:[#allocation2 + $0x50] sm:$0xff]
        %v1021 = vld [vmem:[#allocation2 + $0x60] sm:$0xff]
        %v1022 = vld [vmem:[#allocation2 + $0x70] sm:$0xff]
        %v1023 = vpack.c.bf16 %v1016, %v1015
        %v1024 = vpack.c.bf16 %v1018, %v1017
        %v1025 = vpack.c.bf16 %v1020, %v1019
        %v1026 = vpack.c.bf16 %v1022, %v1021
        %v1027 = vld [vmem:[%s4] sm:$0xff]
        %v1028 = vpack.c.bf16 %v1027, %v1027
        %v1029 = vld [vmem:[#allocation2 + $0x1] sm:$0xff]
        %v1030 = vld [vmem:[#allocation2 + $0x11] sm:$0xff]
        %v1031 = vld [vmem:[#allocation2 + $0x21] sm:$0xff]
        %v1032 = vld [vmem:[#allocation2 + $0x31] sm:$0xff]
        %v1033 = vld [vmem:[#allocation2 + $0x41] sm:$0xff]
        %v1034 = vld [vmem:[#allocation2 + $0x51] sm:$0xff]
        %v1035 = vld [vmem:[#allocation2 + $0x61] sm:$0xff]
        %v1036 = vld [vmem:[#allocation2 + $0x71] sm:$0xff]
        %v1037 = vpack.c.bf16 %v1030, %v1029
        %v1038 = vpack.c.bf16 %v1032, %v1031
        %v1039 = vpack.c.bf16 %v1034, %v1033
        %v1040 = vpack.c.bf16 %v1036, %v1035
        %s1041 = scalar_lea.vmem %s4, 8
        %v1042 = vld [vmem:[%s1041] sm:$0xff]
        %v1043 = vpack.c.bf16 %v1042, %v1042
        %v1045 = vsel %vm984, %v1037, 0
        %v1048 = vsel %vm984, %v1038, 0
        %v1051 = vsel %vm984, %v1039, 0
        %v1054 = vsel %vm984, %v1040, 0
        %vm1056 = vcmask 1043456
        %v1058 = vsel %vm1056, %v1043, 0
        %1060 = vmatpush.bf16.msra.mxu0 0
        %1061 = vmatpush.bf16.msra.mxu0 0
        %1062 = vmatpush.bf16.msra.mxu0 0
        %1063 = vmatpush.bf16.msra.mxu0 0
        %1064 = vmatpush.bf16.msra.mxu0 0
        %1065 = vmatpush.bf16.msra.mxu0 0
        %1066 = vmatpush.bf16.msra.mxu0 0
        %1067 = vmatpush.bf16.msra.mxu0 %v1058
        %1068 = vmatmul.bf16.gmra.mxu0 %v1045
        %v1069 = vpop.f32.mrf.mxu0
        %v1070 = vadd.f32 0.0, %v1069
        %v1071 = vpop.f32.mrf.mxu0
        %v1072 = vadd.f32 0.0, %v1071
        %1073 = vmatmul.bf16.gmra.mxu0 %v1048
        %v1074 = vpop.f32.mrf.mxu0
        %v1075 = vadd.f32 0.0, %v1074
        %v1076 = vpop.f32.mrf.mxu0
        %v1077 = vadd.f32 0.0, %v1076
        %1078 = vmatmul.bf16.gmra.mxu0 %v1051
        %v1079 = vpop.f32.mrf.mxu0
        %v1080 = vadd.f32 0.0, %v1079
        %v1081 = vpop.f32.mrf.mxu0
        %v1082 = vadd.f32 0.0, %v1081
        %1083 = vmatmul.bf16.gmra.mxu0 %v1054
        %v1084 = vpop.f32.mrf.mxu0
        %v1085 = vadd.f32 0.0, %v1084
        %v1086 = vpop.f32.mrf.mxu0
        %v1087 = vadd.f32 0.0, %v1086
        %1088 = vdwg.mxu0
        %v1090 = vsel %vm984, %v1023, 0
        %v1093 = vsel %vm984, %v1024, 0
        %v1096 = vsel %vm984, %v1025, 0
        %v1099 = vsel %vm984, %v1026, 0
        %v1102 = vsel %vm1056, %v1028, 0
        %1104 = vmatpush.bf16.msra.mxu0 0
        %1105 = vmatpush.bf16.msra.mxu0 0
        %1106 = vmatpush.bf16.msra.mxu0 0
        %1107 = vmatpush.bf16.msra.mxu0 0
        %1108 = vmatpush.bf16.msra.mxu0 0
        %1109 = vmatpush.bf16.msra.mxu0 0
        %1110 = vmatpush.bf16.msra.mxu0 0
        %1111 = vmatpush.bf16.msra.mxu0 %v1102
        %1112 = vmatmul.bf16.gmra.mxu0 %v1090
        %v1113 = vpop.f32.mrf.mxu0
        %v1114 = vadd.f32 %v1070, %v1113
        %v1115 = vpop.f32.mrf.mxu0
        %v1116 = vadd.f32 %v1072, %v1115
        %1117 = vmatmul.bf16.gmra.mxu0 %v1093
        %v1118 = vpop.f32.mrf.mxu0
        %v1119 = vadd.f32 %v1075, %v1118
        %v1120 = vpop.f32.mrf.mxu0
        %v1121 = vadd.f32 %v1077, %v1120
        %1122 = vmatmul.bf16.gmra.mxu0 %v1096
        %v1123 = vpop.f32.mrf.mxu0
        %v1124 = vadd.f32 %v1080, %v1123
        %v1125 = vpop.f32.mrf.mxu0
        %v1126 = vadd.f32 %v1082, %v1125
        %1127 = vmatmul.bf16.gmra.mxu0 %v1099
        %v1128 = vpop.f32.mrf.mxu0
        %v1129 = vadd.f32 %v1085, %v1128
        %v1130 = vpop.f32.mrf.mxu0
        %v1131 = vadd.f32 %v1087, %v1130
        %1132 = vdwg.mxu0
        %v1133 = vld [vmem:[#allocation2 + $0x2] sm:$0xff]
        %v1134 = vld [vmem:[#allocation2 + $0x12] sm:$0xff]
        %v1135 = vld [vmem:[#allocation2 + $0x22] sm:$0xff]
        %v1136 = vld [vmem:[#allocation2 + $0x32] sm:$0xff]
        %v1137 = vld [vmem:[#allocation2 + $0x42] sm:$0xff]
        %v1138 = vld [vmem:[#allocation2 + $0x52] sm:$0xff]
        %v1139 = vld [vmem:[#allocation2 + $0x62] sm:$0xff]
        %v1140 = vld [vmem:[#allocation2 + $0x72] sm:$0xff]
        %v1141 = vpack.c.bf16 %v1134, %v1133
        %v1142 = vpack.c.bf16 %v1136, %v1135
        %v1143 = vpack.c.bf16 %v1138, %v1137
        %v1144 = vpack.c.bf16 %v1140, %v1139
        %s1145 = scalar_lea.vmem %s4, 16
        %v1146 = vld [vmem:[%s1145] sm:$0xff]
        %v1147 = vpack.c.bf16 %v1146, %v1146
        %v1149 = vsel %vm984, %v1141, 0
        %v1152 = vsel %vm984, %v1142, 0
        %v1155 = vsel %vm984, %v1143, 0
        %v1158 = vsel %vm984, %v1144, 0
        %v1161 = vsel %vm1056, %v1147, 0
        %1163 = vmatpush.bf16.msra.mxu0 0
        %1164 = vmatpush.bf16.msra.mxu0 0
        %1165 = vmatpush.bf16.msra.mxu0 0
        %1166 = vmatpush.bf16.msra.mxu0 0
        %1167 = vmatpush.bf16.msra.mxu0 0
        %1168 = vmatpush.bf16.msra.mxu0 0
        %1169 = vmatpush.bf16.msra.mxu0 0
        %1170 = vmatpush.bf16.msra.mxu0 %v1161
        %1171 = vmatmul.bf16.gmra.mxu0 %v1149
        %v1172 = vpop.f32.mrf.mxu0
        %v1173 = vadd.f32 0.0, %v1172
        %v1174 = vpop.f32.mrf.mxu0
        %v1175 = vadd.f32 0.0, %v1174
        %1176 = vmatmul.bf16.gmra.mxu0 %v1152
        %v1177 = vpop.f32.mrf.mxu0
        %v1178 = vadd.f32 0.0, %v1177
        %v1179 = vpop.f32.mrf.mxu0
        %v1180 = vadd.f32 0.0, %v1179
        %1181 = vmatmul.bf16.gmra.mxu0 %v1155
        %v1182 = vpop.f32.mrf.mxu0
        %v1183 = vadd.f32 0.0, %v1182
        %v1184 = vpop.f32.mrf.mxu0
        %v1185 = vadd.f32 0.0, %v1184
        %1186 = vmatmul.bf16.gmra.mxu0 %v1158
        %v1187 = vpop.f32.mrf.mxu0
        %v1188 = vadd.f32 0.0, %v1187
        %v1189 = vpop.f32.mrf.mxu0
        %v1190 = vadd.f32 0.0, %v1189
        %1191 = vdwg.mxu0
        %v1192 = vadd.f32 %v1114, %v1173
        %v1193 = vadd.f32 %v1116, %v1175
        %v1194 = vadd.f32 %v1119, %v1178
        %v1195 = vadd.f32 %v1121, %v1180
        %v1196 = vadd.f32 %v1124, %v1183
        %v1197 = vadd.f32 %v1126, %v1185
        %v1198 = vadd.f32 %v1129, %v1188
        %v1199 = vadd.f32 %v1131, %v1190
        %v1200 = vld [vmem:[%s1006] sm:$0xff]
        %v1201 = vld [vmem:[%s1006 + $0x10] sm:$0xff]
        %v1202 = vld [vmem:[%s1006 + $0x20] sm:$0xff]
        %v1203 = vld [vmem:[%s1006 + $0x30] sm:$0xff]
        %v1204 = vld [vmem:[%s1006 + $0x40] sm:$0xff]
        %v1205 = vld [vmem:[%s1006 + $0x50] sm:$0xff]
        %v1206 = vld [vmem:[%s1006 + $0x60] sm:$0xff]
        %v1207 = vld [vmem:[%s1006 + $0x70] sm:$0xff]
        %v1208 = vpack.c.bf16 %v1201, %v1200
        %v1209 = vpack.c.bf16 %v1203, %v1202
        %v1210 = vpack.c.bf16 %v1205, %v1204
        %v1211 = vpack.c.bf16 %v1207, %v1206
        %s1212 = scalar_lea.vmem %s4, 24
        %v1213 = vld [vmem:[%s1212] sm:$0xff]
        %v1214 = vpack.c.bf16 %v1213, %v1213
        %v1216 = vsel %vm984, %v1208, 0
        %v1219 = vsel %vm984, %v1209, 0
        %v1222 = vsel %vm984, %v1210, 0
        %v1225 = vsel %vm984, %v1211, 0
        %v1228 = vsel %vm1056, %v1214, 0
        %1230 = vmatpush.bf16.msra.mxu0 0
        %1231 = vmatpush.bf16.msra.mxu0 0
        %1232 = vmatpush.bf16.msra.mxu0 0
        %1233 = vmatpush.bf16.msra.mxu0 0
        %1234 = vmatpush.bf16.msra.mxu0 0
        %1235 = vmatpush.bf16.msra.mxu0 0
        %1236 = vmatpush.bf16.msra.mxu0 0
        %1237 = vmatpush.bf16.msra.mxu0 %v1228
        %1238 = vmatmul.bf16.gmra.mxu0 %v1216
        %v1239 = vpop.f32.mrf.mxu0
        %v1240 = vadd.f32 0.0, %v1239
        %v1241 = vpop.f32.mrf.mxu0
        %v1242 = vadd.f32 0.0, %v1241
        %1243 = vmatmul.bf16.gmra.mxu0 %v1219
        %v1244 = vpop.f32.mrf.mxu0
        %v1245 = vadd.f32 0.0, %v1244
        %v1246 = vpop.f32.mrf.mxu0
        %v1247 = vadd.f32 0.0, %v1246
        %1248 = vmatmul.bf16.gmra.mxu0 %v1222
        %v1249 = vpop.f32.mrf.mxu0
        %v1250 = vadd.f32 0.0, %v1249
        %v1251 = vpop.f32.mrf.mxu0
        %v1252 = vadd.f32 0.0, %v1251
        %1253 = vmatmul.bf16.gmra.mxu0 %v1225
        %v1254 = vpop.f32.mrf.mxu0
        %v1255 = vadd.f32 0.0, %v1254
        %v1256 = vpop.f32.mrf.mxu0
        %v1257 = vadd.f32 0.0, %v1256
        %1258 = vdwg.mxu0
        %v1259 = vadd.f32 %v1192, %v1240
        %v1260 = vadd.f32 %v1193, %v1242
        %v1261 = vadd.f32 %v1194, %v1245
        %v1262 = vadd.f32 %v1195, %v1247
        %v1263 = vadd.f32 %v1196, %v1250
        %v1264 = vadd.f32 %v1197, %v1252
        %v1265 = vadd.f32 %v1198, %v1255
        %v1266 = vadd.f32 %v1199, %v1257
        %v1267 = vld [vmem:[%s1006 + $0x1] sm:$0xff]
        %v1268 = vld [vmem:[%s1006 + $0x11] sm:$0xff]
        %v1269 = vld [vmem:[%s1006 + $0x21] sm:$0xff]
        %v1270 = vld [vmem:[%s1006 + $0x31] sm:$0xff]
        %v1271 = vld [vmem:[%s1006 + $0x41] sm:$0xff]
        %v1272 = vld [vmem:[%s1006 + $0x51] sm:$0xff]
        %v1273 = vld [vmem:[%s1006 + $0x61] sm:$0xff]
        %v1274 = vld [vmem:[%s1006 + $0x71] sm:$0xff]
        %v1275 = vpack.c.bf16 %v1268, %v1267
        %v1276 = vpack.c.bf16 %v1270, %v1269
        %v1277 = vpack.c.bf16 %v1272, %v1271
        %v1278 = vpack.c.bf16 %v1274, %v1273
        %s1279 = scalar_lea.vmem %s4, 32
        %v1280 = vld [vmem:[%s1279] sm:$0xff]
        %v1281 = vpack.c.bf16 %v1280, %v1280
        %v1283 = vsel %vm984, %v1275, 0
        %v1286 = vsel %vm984, %v1276, 0
        %v1289 = vsel %vm984, %v1277, 0
        %v1292 = vsel %vm984, %v1278, 0
        %v1295 = vsel %vm1056, %v1281, 0
        %1297 = vmatpush.bf16.msra.mxu0 0
        %1298 = vmatpush.bf16.msra.mxu0 0
        %1299 = vmatpush.bf16.msra.mxu0 0
        %1300 = vmatpush.bf16.msra.mxu0 0
        %1301 = vmatpush.bf16.msra.mxu0 0
        %1302 = vmatpush.bf16.msra.mxu0 0
        %1303 = vmatpush.bf16.msra.mxu0 0
        %1304 = vmatpush.bf16.msra.mxu0 %v1295
        %1305 = vmatmul.bf16.gmra.mxu0 %v1283
        %v1306 = vpop.f32.mrf.mxu0
        %v1307 = vadd.f32 0.0, %v1306
        %v1308 = vpop.f32.mrf.mxu0
        %v1309 = vadd.f32 0.0, %v1308
        %1310 = vmatmul.bf16.gmra.mxu0 %v1286
        %v1311 = vpop.f32.mrf.mxu0
        %v1312 = vadd.f32 0.0, %v1311
        %v1313 = vpop.f32.mrf.mxu0
        %v1314 = vadd.f32 0.0, %v1313
        %1315 = vmatmul.bf16.gmra.mxu0 %v1289
        %v1316 = vpop.f32.mrf.mxu0
        %v1317 = vadd.f32 0.0, %v1316
        %v1318 = vpop.f32.mrf.mxu0
        %v1319 = vadd.f32 0.0, %v1318
        %1320 = vmatmul.bf16.gmra.mxu0 %v1292
        %v1321 = vpop.f32.mrf.mxu0
        %v1322 = vadd.f32 0.0, %v1321
        %v1323 = vpop.f32.mrf.mxu0
        %v1324 = vadd.f32 0.0, %v1323
        %1325 = vdwg.mxu0
        %v1326 = vadd.f32 %v1259, %v1307
        %v1327 = vadd.f32 %v1260, %v1309
        %v1328 = vadd.f32 %v1261, %v1312
        %v1329 = vadd.f32 %v1262, %v1314
        %v1330 = vadd.f32 %v1263, %v1317
        %v1331 = vadd.f32 %v1264, %v1319
        %v1332 = vadd.f32 %v1265, %v1322
        %v1333 = vadd.f32 %v1266, %v1324
        %v1334 = vld [vmem:[%s1006 + $0x2] sm:$0xff]
        %v1335 = vld [vmem:[%s1006 + $0x12] sm:$0xff]
        %v1336 = vld [vmem:[%s1006 + $0x22] sm:$0xff]
        %v1337 = vld [vmem:[%s1006 + $0x32] sm:$0xff]
        %v1338 = vld [vmem:[%s1006 + $0x42] sm:$0xff]
        %v1339 = vld [vmem:[%s1006 + $0x52] sm:$0xff]
        %v1340 = vld [vmem:[%s1006 + $0x62] sm:$0xff]
        %v1341 = vld [vmem:[%s1006 + $0x72] sm:$0xff]
        %v1342 = vpack.c.bf16 %v1335, %v1334
        %v1343 = vpack.c.bf16 %v1337, %v1336
        %v1344 = vpack.c.bf16 %v1339, %v1338
        %v1345 = vpack.c.bf16 %v1341, %v1340
        %s1346 = scalar_lea.vmem %s4, 40
        %v1347 = vld [vmem:[%s1346] sm:$0xff]
        %v1348 = vpack.c.bf16 %v1347, %v1347
        %v1350 = vsel %vm984, %v1342, 0
        %v1353 = vsel %vm984, %v1343, 0
        %v1356 = vsel %vm984, %v1344, 0
        %v1359 = vsel %vm984, %v1345, 0
        %v1362 = vsel %vm1056, %v1348, 0
        %1364 = vmatpush.bf16.msra.mxu0 0
        %1365 = vmatpush.bf16.msra.mxu0 0
        %1366 = vmatpush.bf16.msra.mxu0 0
        %1367 = vmatpush.bf16.msra.mxu0 0
        %1368 = vmatpush.bf16.msra.mxu0 0
        %1369 = vmatpush.bf16.msra.mxu0 0
        %1370 = vmatpush.bf16.msra.mxu0 0
        %1371 = vmatpush.bf16.msra.mxu0 %v1362
        %1372 = vmatmul.bf16.gmra.mxu0 %v1350
        %v1373 = vpop.f32.mrf.mxu0
        %v1374 = vadd.f32 0.0, %v1373
        %v1375 = vpop.f32.mrf.mxu0
        %v1376 = vadd.f32 0.0, %v1375
        %1377 = vmatmul.bf16.gmra.mxu0 %v1353
        %v1378 = vpop.f32.mrf.mxu0
        %v1379 = vadd.f32 0.0, %v1378
        %v1380 = vpop.f32.mrf.mxu0
        %v1381 = vadd.f32 0.0, %v1380
        %1382 = vmatmul.bf16.gmra.mxu0 %v1356
        %v1383 = vpop.f32.mrf.mxu0
        %v1384 = vadd.f32 0.0, %v1383
        %v1385 = vpop.f32.mrf.mxu0
        %v1386 = vadd.f32 0.0, %v1385
        %1387 = vmatmul.bf16.gmra.mxu0 %v1359
        %v1388 = vpop.f32.mrf.mxu0
        %v1389 = vadd.f32 0.0, %v1388
        %v1390 = vpop.f32.mrf.mxu0
        %v1391 = vadd.f32 0.0, %v1390
        %1392 = vdwg.mxu0
        %v1393 = vadd.f32 %v1326, %v1374
        %v1394 = vadd.f32 %v1327, %v1376
        %v1395 = vadd.f32 %v1328, %v1379
        %v1396 = vadd.f32 %v1329, %v1381
        %v1397 = vadd.f32 %v1330, %v1384
        %v1398 = vadd.f32 %v1331, %v1386
        %v1399 = vadd.f32 %v1332, %v1389
        %v1400 = vadd.f32 %v1333, %v1391
        %s1401 = scalar_lea.vmem [#allocation2], 32
        %v1402 = vld [vmem:[%s1401] sm:$0xff]
        %v1403 = vld [vmem:[%s1401 + $0x10] sm:$0xff]
        %v1404 = vld [vmem:[%s1401 + $0x20] sm:$0xff]
        %v1405 = vld [vmem:[%s1401 + $0x30] sm:$0xff]
        %v1406 = vld [vmem:[%s1401 + $0x40] sm:$0xff]
        %v1407 = vld [vmem:[%s1401 + $0x50] sm:$0xff]
        %v1408 = vld [vmem:[%s1401 + $0x60] sm:$0xff]
        %v1409 = vld [vmem:[%s1401 + $0x70] sm:$0xff]
        %v1410 = vpack.c.bf16 %v1403, %v1402
        %v1411 = vpack.c.bf16 %v1405, %v1404
        %v1412 = vpack.c.bf16 %v1407, %v1406
        %v1413 = vpack.c.bf16 %v1409, %v1408
        %s1414 = scalar_lea.vmem %s4, 48
        %v1415 = vld [vmem:[%s1414] sm:$0xff]
        %v1416 = vpack.c.bf16 %v1415, %v1415
        %v1418 = vsel %vm984, %v1410, 0
        %v1421 = vsel %vm984, %v1411, 0
        %v1424 = vsel %vm984, %v1412, 0
        %v1427 = vsel %vm984, %v1413, 0
        %v1430 = vsel %vm1056, %v1416, 0
        %1432 = vmatpush.bf16.msra.mxu0 0
        %1433 = vmatpush.bf16.msra.mxu0 0
        %1434 = vmatpush.bf16.msra.mxu0 0
        %1435 = vmatpush.bf16.msra.mxu0 0
        %1436 = vmatpush.bf16.msra.mxu0 0
        %1437 = vmatpush.bf16.msra.mxu0 0
        %1438 = vmatpush.bf16.msra.mxu0 0
        %1439 = vmatpush.bf16.msra.mxu0 %v1430
        %1440 = vmatmul.bf16.gmra.mxu0 %v1418
        %v1441 = vpop.f32.mrf.mxu0
        %v1442 = vadd.f32 0.0, %v1441
        %v1443 = vpop.f32.mrf.mxu0
        %v1444 = vadd.f32 0.0, %v1443
        %1445 = vmatmul.bf16.gmra.mxu0 %v1421
        %v1446 = vpop.f32.mrf.mxu0
        %v1447 = vadd.f32 0.0, %v1446
        %v1448 = vpop.f32.mrf.mxu0
        %v1449 = vadd.f32 0.0, %v1448
        %1450 = vmatmul.bf16.gmra.mxu0 %v1424
        %v1451 = vpop.f32.mrf.mxu0
        %v1452 = vadd.f32 0.0, %v1451
        %v1453 = vpop.f32.mrf.mxu0
        %v1454 = vadd.f32 0.0, %v1453
        %1455 = vmatmul.bf16.gmra.mxu0 %v1427
        %v1456 = vpop.f32.mrf.mxu0
        %v1457 = vadd.f32 0.0, %v1456
        %v1458 = vpop.f32.mrf.mxu0
        %v1459 = vadd.f32 0.0, %v1458
        %1460 = vdwg.mxu0
        %v1461 = vadd.f32 %v1393, %v1442
        %v1462 = vadd.f32 %v1394, %v1444
        %v1463 = vadd.f32 %v1395, %v1447
        %v1464 = vadd.f32 %v1396, %v1449
        %v1465 = vadd.f32 %v1397, %v1452
        %v1466 = vadd.f32 %v1398, %v1454
        %v1467 = vadd.f32 %v1399, %v1457
        %v1468 = vadd.f32 %v1400, %v1459
        %v1469 = vld [vmem:[%s1401 + $0x1] sm:$0xff]
        %v1470 = vld [vmem:[%s1401 + $0x11] sm:$0xff]
        %v1471 = vld [vmem:[%s1401 + $0x21] sm:$0xff]
        %v1472 = vld [vmem:[%s1401 + $0x31] sm:$0xff]
        %v1473 = vld [vmem:[%s1401 + $0x41] sm:$0xff]
        %v1474 = vld [vmem:[%s1401 + $0x51] sm:$0xff]
        %v1475 = vld [vmem:[%s1401 + $0x61] sm:$0xff]
        %v1476 = vld [vmem:[%s1401 + $0x71] sm:$0xff]
        %v1477 = vpack.c.bf16 %v1470, %v1469
        %v1478 = vpack.c.bf16 %v1472, %v1471
        %v1479 = vpack.c.bf16 %v1474, %v1473
        %v1480 = vpack.c.bf16 %v1476, %v1475
        %s1481 = scalar_lea.vmem %s4, 56
        %v1482 = vld [vmem:[%s1481] sm:$0xff]
        %v1483 = vpack.c.bf16 %v1482, %v1482
        %v1485 = vsel %vm984, %v1477, 0
        %v1488 = vsel %vm984, %v1478, 0
        %v1491 = vsel %vm984, %v1479, 0
        %v1494 = vsel %vm984, %v1480, 0
        %v1497 = vsel %vm1056, %v1483, 0
        %1499 = vmatpush.bf16.msra.mxu0 0
        %1500 = vmatpush.bf16.msra.mxu0 0
        %1501 = vmatpush.bf16.msra.mxu0 0
        %1502 = vmatpush.bf16.msra.mxu0 0
        %1503 = vmatpush.bf16.msra.mxu0 0
        %1504 = vmatpush.bf16.msra.mxu0 0
        %1505 = vmatpush.bf16.msra.mxu0 0
        %1506 = vmatpush.bf16.msra.mxu0 %v1497
        %1507 = vmatmul.bf16.gmra.mxu0 %v1485
        %v1508 = vpop.f32.mrf.mxu0
        %v1509 = vadd.f32 0.0, %v1508
        %v1510 = vpop.f32.mrf.mxu0
        %v1511 = vadd.f32 0.0, %v1510
        %1512 = vmatmul.bf16.gmra.mxu0 %v1488
        %v1513 = vpop.f32.mrf.mxu0
        %v1514 = vadd.f32 0.0, %v1513
        %v1515 = vpop.f32.mrf.mxu0
        %v1516 = vadd.f32 0.0, %v1515
        %1517 = vmatmul.bf16.gmra.mxu0 %v1491
        %v1518 = vpop.f32.mrf.mxu0
        %v1519 = vadd.f32 0.0, %v1518
        %v1520 = vpop.f32.mrf.mxu0
        %v1521 = vadd.f32 0.0, %v1520
        %1522 = vmatmul.bf16.gmra.mxu0 %v1494
        %v1523 = vpop.f32.mrf.mxu0
        %v1524 = vadd.f32 0.0, %v1523
        %v1525 = vpop.f32.mrf.mxu0
        %v1526 = vadd.f32 0.0, %v1525
        %1527 = vdwg.mxu0
        %v1528 = vadd.f32 %v1461, %v1509
        %v1529 = vadd.f32 %v1462, %v1511
        %v1530 = vadd.f32 %v1463, %v1514
        %v1531 = vadd.f32 %v1464, %v1516
        %v1532 = vadd.f32 %v1465, %v1519
        %v1533 = vadd.f32 %v1466, %v1521
        %v1534 = vadd.f32 %v1467, %v1524
        %v1535 = vadd.f32 %v1468, %v1526
        %v1536 = vld [vmem:[%s1401 + $0x2] sm:$0xff]
        %v1537 = vld [vmem:[%s1401 + $0x12] sm:$0xff]
        %v1538 = vld [vmem:[%s1401 + $0x22] sm:$0xff]
        %v1539 = vld [vmem:[%s1401 + $0x32] sm:$0xff]
        %v1540 = vld [vmem:[%s1401 + $0x42] sm:$0xff]
        %v1541 = vld [vmem:[%s1401 + $0x52] sm:$0xff]
        %v1542 = vld [vmem:[%s1401 + $0x62] sm:$0xff]
        %v1543 = vld [vmem:[%s1401 + $0x72] sm:$0xff]
        %v1544 = vpack.c.bf16 %v1537, %v1536
        %v1545 = vpack.c.bf16 %v1539, %v1538
        %v1546 = vpack.c.bf16 %v1541, %v1540
        %v1547 = vpack.c.bf16 %v1543, %v1542
        %s1548 = scalar_lea.vmem %s4, 64
        %v1549 = vld [vmem:[%s1548] sm:$0xff]
        %v1550 = vpack.c.bf16 %v1549, %v1549
        %v1552 = vsel %vm984, %v1544, 0
        %v1555 = vsel %vm984, %v1545, 0
        %v1558 = vsel %vm984, %v1546, 0
        %v1561 = vsel %vm984, %v1547, 0
        %v1564 = vsel %vm1056, %v1550, 0
        %1566 = vmatpush.bf16.msra.mxu0 0
        %1567 = vmatpush.bf16.msra.mxu0 0
        %1568 = vmatpush.bf16.msra.mxu0 0
        %1569 = vmatpush.bf16.msra.mxu0 0
        %1570 = vmatpush.bf16.msra.mxu0 0
        %1571 = vmatpush.bf16.msra.mxu0 0
        %1572 = vmatpush.bf16.msra.mxu0 0
        %1573 = vmatpush.bf16.msra.mxu0 %v1564
        %1574 = vmatmul.bf16.gmra.mxu0 %v1552
        %v1575 = vpop.f32.mrf.mxu0
        %v1576 = vadd.f32 0.0, %v1575
        %v1577 = vpop.f32.mrf.mxu0
        %v1578 = vadd.f32 0.0, %v1577
        %1579 = vmatmul.bf16.gmra.mxu0 %v1555
        %v1580 = vpop.f32.mrf.mxu0
        %v1581 = vadd.f32 0.0, %v1580
        %v1582 = vpop.f32.mrf.mxu0
        %v1583 = vadd.f32 0.0, %v1582
        %1584 = vmatmul.bf16.gmra.mxu0 %v1558
        %v1585 = vpop.f32.mrf.mxu0
        %v1586 = vadd.f32 0.0, %v1585
        %v1587 = vpop.f32.mrf.mxu0
        %v1588 = vadd.f32 0.0, %v1587
        %1589 = vmatmul.bf16.gmra.mxu0 %v1561
        %v1590 = vpop.f32.mrf.mxu0
        %v1591 = vadd.f32 0.0, %v1590
        %v1592 = vpop.f32.mrf.mxu0
        %v1593 = vadd.f32 0.0, %v1592
        %1594 = vdwg.mxu0
        %v1595 = vadd.f32 %v1528, %v1576
        %v1596 = vadd.f32 %v1529, %v1578
        %v1597 = vadd.f32 %v1530, %v1581
        %v1598 = vadd.f32 %v1531, %v1583
        %v1599 = vadd.f32 %v1532, %v1586
        %v1600 = vadd.f32 %v1533, %v1588
        %v1601 = vadd.f32 %v1534, %v1591
        %v1602 = vadd.f32 %v1535, %v1593
        %v1603 = vld [vmem:[%s5] sm:$0x1]
        %v1605 = vperm.slane %v1603, 0
        %v1607 = vmul.f32 %v1595, %v1605
        %v1608 = vmul.f32 %v1596, %v1605
        %v1609 = vmul.f32 %v1597, %v1605
        %v1610 = vmul.f32 %v1598, %v1605
        %v1611 = vmul.f32 %v1599, %v1605
        %v1612 = vmul.f32 %v1600, %v1605
        %v1613 = vmul.f32 %v1601, %v1605
        %v1614 = vmul.f32 %v1602, %v1605
        %v1615 = vld [vmem:[%s6] sm:$0x1]
        %v1617 = vperm.slane %v1615, 0
        %v1619 = vadd.f32 %v1607, %v1617
        %v1620 = vadd.f32 %v1608, %v1617
        %v1621 = vadd.f32 %v1609, %v1617
        %v1622 = vadd.f32 %v1610, %v1617
        %v1623 = vadd.f32 %v1611, %v1617
        %v1624 = vadd.f32 %v1612, %v1617
        %v1625 = vadd.f32 %v1613, %v1617
        %v1626 = vadd.f32 %v1614, %v1617
        %v1627 = vld [vmem:[%s614] sm:$0xff]
        %v1628 = vld [vmem:[%s614 + $0x10] sm:$0xff]
        %v1629 = vld [vmem:[%s614 + $0x20] sm:$0xff]
        %v1630 = vld [vmem:[%s614 + $0x30] sm:$0xff]
        %v1631 = vld [vmem:[%s614 + $0x40] sm:$0xff]
        %v1632 = vld [vmem:[%s614 + $0x50] sm:$0xff]
        %v1633 = vld [vmem:[%s614 + $0x60] sm:$0xff]
        %v1634 = vld [vmem:[%s614 + $0x70] sm:$0xff]
        %v1635 = vpack.c.bf16 %v1628, %v1627
        %v1636 = vpack.c.bf16 %v1630, %v1629
        %v1637 = vpack.c.bf16 %v1632, %v1631
        %v1638 = vpack.c.bf16 %v1634, %v1633
        %v1639 = vld [vmem:[%s7] sm:$0xf]
        %v1640 = vpack.c.bf16 %v1639, %v1639
        %v1642 = vsel %vm389, %v1635, 0
        %v1645 = vsel %vm389, %v1636, 0
        %v1648 = vsel %vm389, %v1637, 0
        %v1651 = vsel %vm389, %v1638, 0
        %v1654 = vsel %vm402, %v1640, 0
        %1656 = vmatpush.bf16.msra.mxu0 0
        %1657 = vmatpush.bf16.msra.mxu0 0
        %1658 = vmatpush.bf16.msra.mxu0 0
        %1659 = vmatpush.bf16.msra.mxu0 0
        %1660 = vmatpush.bf16.msra.mxu0 0
        %1661 = vmatpush.bf16.msra.mxu0 0
        %1662 = vmatpush.bf16.msra.mxu0 0
        %1663 = vmatpush.bf16.msra.mxu0 %v1654
        %1664 = vmatmul.bf16.gmra.mxu0 %v1642
        %v1665 = vpop.f32.mrf.mxu0
        %v1666 = vadd.f32 0.0, %v1665
        %v1667 = vpop.f32.mrf.mxu0
        %v1668 = vadd.f32 0.0, %v1667
        %1669 = vmatmul.bf16.gmra.mxu0 %v1645
        %v1670 = vpop.f32.mrf.mxu0
        %v1671 = vadd.f32 0.0, %v1670
        %v1672 = vpop.f32.mrf.mxu0
        %v1673 = vadd.f32 0.0, %v1672
        %1674 = vmatmul.bf16.gmra.mxu0 %v1648
        %v1675 = vpop.f32.mrf.mxu0
        %v1676 = vadd.f32 0.0, %v1675
        %v1677 = vpop.f32.mrf.mxu0
        %v1678 = vadd.f32 0.0, %v1677
        %1679 = vmatmul.bf16.gmra.mxu0 %v1651
        %v1680 = vpop.f32.mrf.mxu0
        %v1681 = vadd.f32 0.0, %v1680
        %v1682 = vpop.f32.mrf.mxu0
        %v1683 = vadd.f32 0.0, %v1682
        %1684 = vdwg.mxu0
        %v1685 = vld [vmem:[%s8] sm:$0x1]
        %v1687 = vperm.slane %v1685, 0
        %v1689 = vmul.f32 %v1666, %v1687
        %v1690 = vmul.f32 %v1668, %v1687
        %v1691 = vmul.f32 %v1671, %v1687
        %v1692 = vmul.f32 %v1673, %v1687
        %v1693 = vmul.f32 %v1676, %v1687
        %v1694 = vmul.f32 %v1678, %v1687
        %v1695 = vmul.f32 %v1681, %v1687
        %v1696 = vmul.f32 %v1683, %v1687
        %v1697 = vld [vmem:[%s9] sm:$0x1]
        %v1699 = vperm.slane %v1697, 0
        %v1701 = vadd.f32 %v1689, %v1699
        %v1702 = vadd.f32 %v1690, %v1699
        %v1703 = vadd.f32 %v1691, %v1699
        %v1704 = vadd.f32 %v1692, %v1699
        %v1705 = vadd.f32 %v1693, %v1699
        %v1706 = vadd.f32 %v1694, %v1699
        %v1707 = vadd.f32 %v1695, %v1699
        %v1708 = vadd.f32 %v1696, %v1699
        %v1709 = vadd.f32 %v1619, %v1701
        %v1710 = vadd.f32 %v1620, %v1702
        %v1711 = vadd.f32 %v1621, %v1703
        %v1712 = vadd.f32 %v1622, %v1704
        %v1713 = vadd.f32 %v1623, %v1705
        %v1714 = vadd.f32 %v1624, %v1706
        %v1715 = vadd.f32 %v1625, %v1707
        %v1716 = vadd.f32 %v1626, %v1708
        %v1717 = vmax.f32 %v1709, 0.0
        %v1718 = vmax.f32 %v1710, 0.0
        %v1719 = vmax.f32 %v1711, 0.0
        %v1720 = vmax.f32 %v1712, 0.0
        %v1721 = vmax.f32 %v1713, 0.0
        %v1722 = vmax.f32 %v1714, 0.0
        %v1723 = vmax.f32 %v1715, 0.0
        %v1724 = vmax.f32 %v1716, 0.0
        %1725 = vst.msk [vmem:[%s352] sm:$0xff] %vm984, %v1717
        %1726 = vst.msk [vmem:[%s352 + $0x8] sm:$0xff] %vm984, %v1718
        %1727 = vst.msk [vmem:[%s352 + $0x10] sm:$0xff] %vm984, %v1719
        %1728 = vst.msk [vmem:[%s352 + $0x18] sm:$0xff] %vm984, %v1720
        %1729 = vst.msk [vmem:[%s352 + $0x20] sm:$0xff] %vm984, %v1721
        %1730 = vst.msk [vmem:[%s352 + $0x28] sm:$0xff] %vm984, %v1722
        %1731 = vst.msk [vmem:[%s352 + $0x30] sm:$0xff] %vm984, %v1723
        %1732 = vst.msk [vmem:[%s352 + $0x38] sm:$0xff] %vm984, %v1724
        %s1733 = sand.u32 %s247, 1
        %s1734 = scalar_lea.sflag [#allocation4], %s1733
        %s1735 = sand.u32 %s247, 1
        %s1736 = smul.addr %s1735, 64
        %s1737 = scalar_lea.vmem [#allocation3], %s1736
        // Predicated region
        $region61: #{tpu_custom_call.1} parent=59 // pred_check
          %p1738 = pneg %p257
        $region62: #{tpu_custom_call.1} parent=59 // pred_check_branch
          %1740 = sbr.rel (%p1738) target = $region64
        $region63: #{tpu_custom_call.1} parent=59 // pred_region
          %1742 = vsyncadd %s1734, 0
          %s1743 = smul.addr %s24, 8
          %s1744 = smul.addr %s1743, 8
          %s1745 = scalar_lea.hbm %s10, %s1744
          %s1746 = sshll.u32 %s1737, 4
          %s1747 = int_to_ptr.vmem [resolvable:$true] %s1746
          %s1748 = sshll.u32 %s1745, 4
          %s1749 = int_to_ptr.hbm [resolvable:$true] %s1748
          %1754 = dma.vmem_to_hbm [thread:$0]  %s1747, 1024, %s1749, %s1734, 128, 128, 8
        $region64: #{tpu_custom_call.1} parent=59 // pred_fallthru
          _
      $region60: #{tpu_custom_call.1} parent=5 // pred_fallthru
        _
      %p1755 = scmp.le.s32.totalorder 2, %s19
      // Predicated region
      $region65: #{tpu_custom_call.1} parent=5 // pred_check
        %p1756 = pneg %p1755
      $region66: #{tpu_custom_call.1} parent=5 // pred_check_branch
        %1758 = sbr.rel (%p1756) target = $region68
      $region67: #{tpu_custom_call.1} parent=5 // pred_region
        %s1759 = ssub.s32 %s19, 2
        // Predicated region
        $region69: #{tpu_custom_call.1} parent=67 // pred_check
          %p1760 = pneg %p263
        $region70: #{tpu_custom_call.1} parent=67 // pred_check_branch
          %1762 = sbr.rel (%p1760) target = $region72
        $region71: #{tpu_custom_call.1} parent=67 // pred_region
          %s1763 = sand.u32 %s248, 1
          %s1764 = scalar_lea.sflag [#allocation4], %s1763
          %s1765 = sand.u32 %s248, 1
          %s1766 = smul.addr %s1765, 64
          %s1767 = scalar_lea.vmem [#allocation3], %s1766
          %1769 = dma.done %s1764, 1024
        $region72: #{tpu_custom_call.1} parent=67 // pred_fallthru
          _
      $region68: #{tpu_custom_call.1} parent=5 // pred_fallthru
        _
    $region6: #{tpu_custom_call.1} parent=1 // loop_footer
      %s23 = sadd.s32 1, %s19
    $region7: #{tpu_custom_call.1} parent=1 // loop_footer_branch
      %18 = sbr.rel target = $region3
    $region8: #{tpu_custom_call.1} parent=1 // loop_exit
      _
    %1770 = vsyncpa [#allocation4], 1
    %s1771 = scalar_lea.sflag [#allocation4], 1
    %1772 = vsyncpa %s1771, 1

</llo_original>
